<compile_context>
chip_gen: v7x
topology: tpu7x:2x2x1
jax: 0.10.0
libtpu: 0.0.40
codegen_flags: <defaults>
</compile_context>

<pallas_src>
import functools

import jax
import jax.numpy as jnp
from jax import lax
from jax.experimental import pallas as pl
from jax.experimental.pallas import tpu as pltpu


def _round_up(x, m):
    return (x + m - 1) // m * m


def _pad_gate_rows(w, h, hp):
    """(4h, D) -> (4hp, D): pad each of the 4 gate blocks independently."""
    d = w.shape[-1]
    w4 = w.reshape(4, h, d)
    w4 = jnp.pad(w4, ((0, 0), (0, hp - h), (0, 0)))
    return w4.reshape(4 * hp, d)


def _lstm_kernel(x_ref, h0_ref, c0_ref, wih_ref, whh_ref, bias_ref,
                 h_out_ref, c_out_ref, h_sc, c_sc,
                 *, total_steps, chunk_steps):
    """One grid step == one chunk of `chunk_steps` time steps.

    x_ref   : (Tc, TB, Ip)  bf16  raw input chunk
    wih_ref : (Ip, 4Hp)     bf16  input weight (pre-transposed, gate-padded)
    whh_ref : (Hp, 4Hp)     bf16  recurrent weight (pre-transposed)
    bias_ref: (1, 4Hp)      f32   combined bias (b_i2h + b_h2h)
    h/c carried in VMEM scratch across time chunks, in vregs within a chunk.
    """
    chunk = pl.program_id(1)
    hp = h_sc.shape[-1]

    @pl.when(chunk == 0)
    def _():
        h_sc[...] = h0_ref[...]
        c_sc[...] = c0_ref[...]

    # Only emit the padded-time mask if the last chunk is partial (static).
    needs_mask = (total_steps % chunk_steps) != 0
    n_valid = jnp.minimum(total_steps - chunk * chunk_steps, chunk_steps)

    def step(s, carry):
        h, c = carry
        # Input projection for this step (no serial dependence on h).
        xp = jnp.dot(x_ref[s], wih_ref[...],
                     preferred_element_type=jnp.float32)
        # Recurrent projection (serial dependence).
        hh = jnp.dot(h.astype(jnp.bfloat16), whh_ref[...],
                     preferred_element_type=jnp.float32)
        preact = xp + hh + bias_ref[...]
        gates = jax.nn.sigmoid(preact[:, :3 * hp])
        g_t = jnp.tanh(preact[:, 3 * hp:])
        i_t = gates[:, :hp]
        f_t = gates[:, hp:2 * hp]
        o_t = gates[:, 2 * hp:]
        c_new = c * f_t + i_t * g_t
        h_new = o_t * jnp.tanh(c_new)
        if needs_mask:
            valid = s < n_valid
            h_new = jnp.where(valid, h_new, h)
            c_new = jnp.where(valid, c_new, c)
        return (h_new, c_new)

    h, c = lax.fori_loop(0, chunk_steps, step, (h_sc[...], c_sc[...]),
                         unroll=True)
    h_sc[...] = h
    c_sc[...] = c

    @pl.when(chunk == pl.num_programs(1) - 1)
    def _():
        h_out_ref[...] = h
        c_out_ref[...] = c


def lstm_forward(x, h0, c0, w_i2h, b_i2h, w_h2h, b_h2h,
                 *, time_chunk=32, batch_tile=None):
    """
    x:     (T, B, I)  h0,c0: (B, H)
    w_i2h: (4H, I)    b_i2h: (4H,)     (PyTorch Linear layout, gates [i,f,o,g])
    w_h2h: (4H, H)    b_h2h: (4H,)

    Returns (o, (h, c)) mirroring the PyTorch module's forward (whose
    `th.stack(o, dim=0)` of the *last* step output equals the final hidden).
    """
    f32 = jnp.float32
    bf16 = jnp.bfloat16
    T, B, I = x.shape
    H = h0.shape[-1]

    hp = _round_up(H, 128)                       # lane-aligned gate blocks
    ip = _round_up(I, 128)                       # lane-aligned input width
    bp = _round_up(B, 8)                         # sublane-aligned batch
    tc = max(1, min(time_chunk, T))              # time steps per grid iter
    tp = _round_up(T, tc)
    if batch_tile is None:
        tb = bp
    else:
        tb = _round_up(min(batch_tile, bp), 8)
        bp = _round_up(bp, tb)

    # --- Gate-block padded, pre-transposed bf16 weights; f32 bias ----------
    wih_p = _pad_gate_rows(w_i2h.astype(f32), H, hp)          # (4hp, I)
    wih_p = jnp.pad(wih_p, ((0, 0), (0, ip - I)))             # (4hp, ip)
    wih_t = wih_p.T.astype(bf16)                              # (ip, 4hp)

    whh_p = _pad_gate_rows(w_h2h.astype(f32), H, hp)          # (4hp, H)
    whh_p = jnp.pad(whh_p, ((0, 0), (0, hp - H)))             # (4hp, hp)
    whh_t = whh_p.T.astype(bf16)                              # (hp, 4hp)

    bias = (b_i2h + b_h2h).astype(f32).reshape(4, H)
    bias = jnp.pad(bias, ((0, 0), (0, hp - H))).reshape(1, 4 * hp)

    # --- Padded inputs / states --------------------------------------------
    x_p = jnp.pad(x.astype(bf16),
                  ((0, tp - T), (0, bp - B), (0, ip - I)))     # (tp, bp, ip)
    h0_p = jnp.pad(h0.astype(f32), ((0, bp - B), (0, hp - H)))
    c0_p = jnp.pad(c0.astype(f32), ((0, bp - B), (0, hp - H)))

    n_btiles = bp // tb
    n_chunks = tp // tc

    # Explicit VMEM budget (double-buffered x chunk + weights + states).
    vmem_bytes = (2 * tc * tb * ip * 2          # x chunks (bf16, 2 bufs)
                  + 2 * ip * 4 * hp * 2         # Wih^T (bf16, 2 bufs)
                  + 2 * hp * 4 * hp * 2         # Whh^T (bf16, 2 bufs)
                  + 2 * 4 * hp * 4              # bias
                  + 8 * tb * hp * 4             # h0/c0/outputs
                  + 2 * tb * hp * 4)            # scratch carries
    vmem_limit = int(min(max(2 * vmem_bytes, 4 << 20), 32 << 20))

    kernel = functools.partial(_lstm_kernel, total_steps=T, chunk_steps=tc)

    h_out, c_out = pl.pallas_call(
        kernel,
        out_shape=(jax.ShapeDtypeStruct((bp, hp), f32),
                   jax.ShapeDtypeStruct((bp, hp), f32)),
        grid_spec=pltpu.PrefetchScalarGridSpec(
            num_scalar_prefetch=0,
            grid=(n_btiles, n_chunks),
            in_specs=[
                pl.BlockSpec((tc, tb, ip), lambda b, t: (t, b, 0)),   # x
                pl.BlockSpec((tb, hp), lambda b, t: (b, 0)),          # h0
                pl.BlockSpec((tb, hp), lambda b, t: (b, 0)),          # c0
                pl.BlockSpec((ip, 4 * hp), lambda b, t: (0, 0)),      # Wih^T
                pl.BlockSpec((hp, 4 * hp), lambda b, t: (0, 0)),      # Whh^T
                pl.BlockSpec((1, 4 * hp), lambda b, t: (0, 0)),       # bias
            ],
            out_specs=[
                pl.BlockSpec((tb, hp), lambda b, t: (b, 0)),          # final h
                pl.BlockSpec((tb, hp), lambda b, t: (b, 0)),          # final c
            ],
            scratch_shapes=[
                pltpu.VMEM((tb, hp), f32),    # h carry
                pltpu.VMEM((tb, hp), f32),    # c carry
            ],
        ),
        compiler_params=pltpu.CompilerParams(
            dimension_semantics=("parallel", "arbitrary"),
            vmem_limit_bytes=vmem_limit),
    )(x_p, h0_p, c0_p, wih_t, whh_t, bias)

    h_final = h_out[:B, :H]
    c_final = c_out[:B, :H]
    return h_final, (h_final, c_final)


def init_params(key, input_size, hidden_size):
    """Deterministic init mimicking reset_parameters: xavier-normal for i2h,
    orthogonal for h2h, zero biases."""
    k1, k2 = jax.random.split(key)
    fan_in, fan_out = input_size, 4 * hidden_size
    std = (2.0 / (fan_in + fan_out)) ** 0.5
    w_i2h = std * jax.random.normal(k1, (4 * hidden_size, input_size), jnp.float32)

    a = jax.random.normal(k2, (4 * hidden_size, hidden_size), jnp.float32)
    q, r = jnp.linalg.qr(a)
    q = q * jnp.sign(jnp.diag(r))[None, :]            # orthogonal columns
    w_h2h = q.astype(jnp.float32)                     # (4H, H)

    b_i2h = jnp.zeros((4 * hidden_size,), jnp.float32)
    b_h2h = jnp.zeros((4 * hidden_size,), jnp.float32)
    return w_i2h, b_i2h, w_h2h, b_h2h


def lstm_reference(x, h0, c0, w_i2h, b_i2h, w_h2h, b_h2h):
    """Pure-JAX f32 reference matching the PyTorch forward."""
    H = h0.shape[-1]
    h, c = h0, c0
    for t in range(x.shape[0]):
        preact = x[t] @ w_i2h.T + b_i2h + h @ w_h2h.T + b_h2h
        gates = jax.nn.sigmoid(preact[:, :3 * H])
        g = jnp.tanh(preact[:, 3 * H:])
        i_t, f_t, o_t = gates[:, :H], gates[:, H:2 * H], gates[:, 2 * H:]
        c = c * f_t + i_t * g
        h = o_t * jnp.tanh(c)
    return h, (h, c)


if __name__ == "__main__":
    seq_len, batch, input_size, hidden_size = 8, 4, 16, 32

    key = jax.random.PRNGKey(0)
    kx, kh, kc, kp = jax.random.split(key, 4)
    x = jax.random.normal(kx, (seq_len, batch, input_size), jnp.float32)
    h0 = jax.random.normal(kh, (batch, hidden_size), jnp.float32)
    c0 = jax.random.normal(kc, (batch, hidden_size), jnp.float32)
    w_i2h, b_i2h, w_h2h, b_h2h = init_params(kp, input_size, hidden_size)

    # time_chunk=4 -> 2 time chunks, exercising the cross-chunk h/c carry.
    o, (h, c) = lstm_forward(x, h0, c0, w_i2h, b_i2h, w_h2h, b_h2h,
                             time_chunk=4)
    jax.block_until_ready((o, h, c))

    o_ref, (h_ref, c_ref) = lstm_reference(x, h0, c0, w_i2h, b_i2h, w_h2h, b_h2h)
    # bf16 MXU operands (f32 accumulation) vs pure-f32 reference -> relaxed tol.
    assert jnp.allclose(h, h_ref, atol=5e-2, rtol=5e-2)
    assert jnp.allclose(c, c_ref, atol=5e-2, rtol=5e-2)
    assert jnp.allclose(o, o_ref, atol=5e-2, rtol=5e-2)

    print("KERNEL_OK")
</pallas_src>

<mosaic_0001>
module attributes {stable_mosaic.version = 11 : i64} {
  func.func @_lstm_kernel(%arg0: i32, %arg1: i32, %arg2: memref<4x8x128xbf16, #tpu.memory_space<vmem>>, %arg3: memref<8x128xf32, #tpu.memory_space<vmem>>, %arg4: memref<8x128xf32, #tpu.memory_space<vmem>>, %arg5: memref<128x512xbf16, #tpu.memory_space<vmem>>, %arg6: memref<128x512xbf16, #tpu.memory_space<vmem>>, %arg7: memref<1x512xf32, #tpu.memory_space<vmem>>, %arg8: memref<8x128xf32, #tpu.memory_space<vmem>>, %arg9: memref<8x128xf32, #tpu.memory_space<vmem>>, %arg10: memref<8x128xf32, #tpu.memory_space<vmem>>, %arg11: memref<8x128xf32, #tpu.memory_space<vmem>>) attributes {dimension_semantics = [#tpu.dimension_semantics<parallel>, #tpu.dimension_semantics<arbitrary>], iteration_bounds = array<i64: 1, 2>, scalar_prefetch = 0 : i64, scratch_operands = 2 : i64, tpu.core_type = #tpu.core_type<tc>, window_params = [{transform_indices = @transform_0, window_bounds = array<i64: 4, 8, 128>}, {transform_indices = @transform_1, window_bounds = array<i64: 8, 128>}, {transform_indices = @transform_2, window_bounds = array<i64: 8, 128>}, {pipeline_mode = #tpu.pipeline_mode<synchronous>, transform_indices = @transform_3, window_bounds = array<i64: 128, 512>}, {pipeline_mode = #tpu.pipeline_mode<synchronous>, transform_indices = @transform_4, window_bounds = array<i64: 128, 512>}, {pipeline_mode = #tpu.pipeline_mode<synchronous>, transform_indices = @transform_5, window_bounds = array<i64: 1, 512>}, {transform_indices = @transform_6, window_bounds = array<i64: 8, 128>}, {transform_indices = @transform_7, window_bounds = array<i64: 8, 128>}]} {
    %c0_i32 = arith.constant 0 : i32
    %0 = arith.cmpi eq, %arg1, %c0_i32 : i32
    %1 = arith.extui %0 : i1 to i32
    %c0_i32_0 = arith.constant 0 : i32
    %2 = arith.cmpi ne, %1, %c0_i32_0 : i32
    scf.if %2 {
      %c0_54 = arith.constant 0 : index
      %c0_55 = arith.constant 0 : index
      %122 = vector.load %arg3[%c0_54, %c0_55] : memref<8x128xf32, #tpu.memory_space<vmem>>, vector<8x128xf32>
      %c0_56 = arith.constant 0 : index
      %c0_57 = arith.constant 0 : index
      %123 = vector.load %arg10[%c0_56, %c0_57] : memref<8x128xf32, #tpu.memory_space<vmem>>, vector<8x128xf32>
      tpu.vector_store %arg10[%c0_56, %c0_57], %122 {strides = array<i32>} : memref<8x128xf32, #tpu.memory_space<vmem>>, vector<8x128xf32>,
      %c0_58 = arith.constant 0 : index
      %c0_59 = arith.constant 0 : index
      %124 = vector.load %arg4[%c0_58, %c0_59] : memref<8x128xf32, #tpu.memory_space<vmem>>, vector<8x128xf32>
      %c0_60 = arith.constant 0 : index
      %c0_61 = arith.constant 0 : index
      %125 = vector.load %arg11[%c0_60, %c0_61] : memref<8x128xf32, #tpu.memory_space<vmem>>, vector<8x128xf32>
      tpu.vector_store %arg11[%c0_60, %c0_61], %124 {strides = array<i32>} : memref<8x128xf32, #tpu.memory_space<vmem>>, vector<8x128xf32>,
    } else {
    }
    %c0 = arith.constant 0 : index
    %c0_1 = arith.constant 0 : index
    %3 = vector.load %arg10[%c0, %c0_1] : memref<8x128xf32, #tpu.memory_space<vmem>>, vector<8x128xf32>
    %c0_2 = arith.constant 0 : index
    %c0_3 = arith.constant 0 : index
    %4 = vector.load %arg11[%c0_2, %c0_3] : memref<8x128xf32, #tpu.memory_space<vmem>>, vector<8x128xf32>
    %c0_i32_4 = arith.constant 0 : i32
    %5 = arith.index_cast %c0_i32_4 : i32 to index
    %c0_5 = arith.constant 0 : index
    %c0_6 = arith.constant 0 : index
    %6 = vector.load %arg2[%5, %c0_5, %c0_6] : memref<4x8x128xbf16, #tpu.memory_space<vmem>>, vector<1x8x128xbf16>
    %7 = vector.shape_cast %6 : vector<1x8x128xbf16> to vector<8x128xbf16>
    %c0_7 = arith.constant 0 : index
    %c0_8 = arith.constant 0 : index
    %8 = vector.load %arg5[%c0_7, %c0_8] : memref<128x512xbf16, #tpu.memory_space<vmem>>, vector<128x512xbf16>
    %cst = arith.constant dense<0.000000e+00> : vector<8x512xf32>
    %9 = tpu.matmul %7, %8, %cst {dimension_numbers = #tpu.dot_dimension_numbers<[1], [0], [0], [1], [0, 0, 1, 1], [], []>} : vector<8x128xbf16>, vector<128x512xbf16>, vector<8x512xf32> -> vector<8x512xf32>
    %10 = arith.truncf %3 : vector<8x128xf32> to vector<8x128xbf16>
    %c0_9 = arith.constant 0 : index
    %c0_10 = arith.constant 0 : index
    %11 = vector.load %arg6[%c0_9, %c0_10] : memref<128x512xbf16, #tpu.memory_space<vmem>>, vector<128x512xbf16>
    %cst_11 = arith.constant dense<0.000000e+00> : vector<8x512xf32>
    %12 = tpu.matmul %10, %11, %cst_11 {dimension_numbers = #tpu.dot_dimension_numbers<[1], [0], [0], [1], [0, 0, 1, 1], [], []>} : vector<8x128xbf16>, vector<128x512xbf16>, vector<8x512xf32> -> vector<8x512xf32>
    %13 = arith.addf %9, %12 : vector<8x512xf32>
    %c0_12 = arith.constant 0 : index
    %c0_13 = arith.constant 0 : index
    %14 = vector.load %arg7[%c0_12, %c0_13] : memref<1x512xf32, #tpu.memory_space<vmem>>, vector<1x512xf32>
    %15 = vector.broadcast %14 : vector<1x512xf32> to vector<8x512xf32>
    %16 = arith.addf %13, %15 : vector<8x512xf32>
    %17 = vector.extract_strided_slice %16 {offsets = [0, 0], sizes = [8, 384], strides = [1, 1]} : vector<8x512xf32> to vector<8x384xf32>
    %18 = arith.negf %17 : vector<8x384xf32>
    %19 = math.exp %18 : vector<8x384xf32>
    %cst_14 = arith.constant 1.000000e+00 : f32
    %20 = vector.broadcast %cst_14 : f32 to vector<8x384xf32>
    %21 = arith.addf %20, %19 : vector<8x384xf32>
    %22 = arith.divf %20, %21 : vector<8x384xf32>
    %23 = vector.extract_strided_slice %16 {offsets = [0, 384], sizes = [8, 128], strides = [1, 1]} : vector<8x512xf32> to vector<8x128xf32>
    %24 = math.tanh %23 : vector<8x128xf32>
    %25 = vector.extract_strided_slice %22 {offsets = [0, 0], sizes = [8, 128], strides = [1, 1]} : vector<8x384xf32> to vector<8x128xf32>
    %26 = vector.extract_strided_slice %22 {offsets = [0, 128], sizes = [8, 128], strides = [1, 1]} : vector<8x384xf32> to vector<8x128xf32>
    %27 = vector.extract_strided_slice %22 {offsets = [0, 256], sizes = [8, 128], strides = [1, 1]} : vector<8x384xf32> to vector<8x128xf32>
    %28 = arith.mulf %4, %26 : vector<8x128xf32>
    %29 = arith.mulf %25, %24 : vector<8x128xf32>
    %30 = arith.addf %28, %29 : vector<8x128xf32>
    %31 = math.tanh %30 : vector<8x128xf32>
    %32 = arith.mulf %27, %31 : vector<8x128xf32>
    %c1_i32 = arith.constant 1 : i32
    %33 = arith.index_cast %c1_i32 : i32 to index
    %c0_15 = arith.constant 0 : index
    %c0_16 = arith.constant 0 : index
    %34 = vector.load %arg2[%33, %c0_15, %c0_16] : memref<4x8x128xbf16, #tpu.memory_space<vmem>>, vector<1x8x128xbf16>
    %35 = vector.shape_cast %34 : vector<1x8x128xbf16> to vector<8x128xbf16>
    %c0_17 = arith.constant 0 : index
    %c0_18 = arith.constant 0 : index
    %36 = vector.load %arg5[%c0_17, %c0_18] : memref<128x512xbf16, #tpu.memory_space<vmem>>, vector<128x512xbf16>
    %cst_19 = arith.constant dense<0.000000e+00> : vector<8x512xf32>
    %37 = tpu.matmul %35, %36, %cst_19 {dimension_numbers = #tpu.dot_dimension_numbers<[1], [0], [0], [1], [0, 0, 1, 1], [], []>} : vector<8x128xbf16>, vector<128x512xbf16>, vector<8x512xf32> -> vector<8x512xf32>
    %38 = arith.truncf %32 : vector<8x128xf32> to vector<8x128xbf16>
    %c0_20 = arith.constant 0 : index
    %c0_21 = arith.constant 0 : index
    %39 = vector.load %arg6[%c0_20, %c0_21] : memref<128x512xbf16, #tpu.memory_space<vmem>>, vector<128x512xbf16>
    %cst_22 = arith.constant dense<0.000000e+00> : vector<8x512xf32>
    %40 = tpu.matmul %38, %39, %cst_22 {dimension_numbers = #tpu.dot_dimension_numbers<[1], [0], [0], [1], [0, 0, 1, 1], [], []>} : vector<8x128xbf16>, vector<128x512xbf16>, vector<8x512xf32> -> vector<8x512xf32>
    %41 = arith.addf %37, %40 : vector<8x512xf32>
    %c0_23 = arith.constant 0 : index
    %c0_24 = arith.constant 0 : index
    %42 = vector.load %arg7[%c0_23, %c0_24] : memref<1x512xf32, #tpu.memory_space<vmem>>, vector<1x512xf32>
    %43 = vector.broadcast %42 : vector<1x512xf32> to vector<8x512xf32>
    %44 = arith.addf %41, %43 : vector<8x512xf32>
    %45 = vector.extract_strided_slice %44 {offsets = [0, 0], sizes = [8, 384], strides = [1, 1]} : vector<8x512xf32> to vector<8x384xf32>
    %46 = arith.negf %45 : vector<8x384xf32>
    %47 = math.exp %46 : vector<8x384xf32>
    %cst_25 = arith.constant 1.000000e+00 : f32
    %48 = vector.broadcast %cst_25 : f32 to vector<8x384xf32>
    %49 = arith.addf %48, %47 : vector<8x384xf32>
    %50 = arith.divf %48, %49 : vector<8x384xf32>
    %51 = vector.extract_strided_slice %44 {offsets = [0, 384], sizes = [8, 128], strides = [1, 1]} : vector<8x512xf32> to vector<8x128xf32>
    %52 = math.tanh %51 : vector<8x128xf32>
    %53 = vector.extract_strided_slice %50 {offsets = [0, 0], sizes = [8, 128], strides = [1, 1]} : vector<8x384xf32> to vector<8x128xf32>
    %54 = vector.extract_strided_slice %50 {offsets = [0, 128], sizes = [8, 128], strides = [1, 1]} : vector<8x384xf32> to vector<8x128xf32>
    %55 = vector.extract_strided_slice %50 {offsets = [0, 256], sizes = [8, 128], strides = [1, 1]} : vector<8x384xf32> to vector<8x128xf32>
    %56 = arith.mulf %30, %54 : vector<8x128xf32>
    %57 = arith.mulf %53, %52 : vector<8x128xf32>
    %58 = arith.addf %56, %57 : vector<8x128xf32>
    %59 = math.tanh %58 : vector<8x128xf32>
    %60 = arith.mulf %55, %59 : vector<8x128xf32>
    %c2_i32 = arith.constant 2 : i32
    %61 = arith.index_cast %c2_i32 : i32 to index
    %c0_26 = arith.constant 0 : index
    %c0_27 = arith.constant 0 : index
    %62 = vector.load %arg2[%61, %c0_26, %c0_27] : memref<4x8x128xbf16, #tpu.memory_space<vmem>>, vector<1x8x128xbf16>
    %63 = vector.shape_cast %62 : vector<1x8x128xbf16> to vector<8x128xbf16>
    %c0_28 = arith.constant 0 : index
    %c0_29 = arith.constant 0 : index
    %64 = vector.load %arg5[%c0_28, %c0_29] : memref<128x512xbf16, #tpu.memory_space<vmem>>, vector<128x512xbf16>
    %cst_30 = arith.constant dense<0.000000e+00> : vector<8x512xf32>
    %65 = tpu.matmul %63, %64, %cst_30 {dimension_numbers = #tpu.dot_dimension_numbers<[1], [0], [0], [1], [0, 0, 1, 1], [], []>} : vector<8x128xbf16>, vector<128x512xbf16>, vector<8x512xf32> -> vector<8x512xf32>
    %66 = arith.truncf %60 : vector<8x128xf32> to vector<8x128xbf16>
    %c0_31 = arith.constant 0 : index
    %c0_32 = arith.constant 0 : index
    %67 = vector.load %arg6[%c0_31, %c0_32] : memref<128x512xbf16, #tpu.memory_space<vmem>>, vector<128x512xbf16>
    %cst_33 = arith.constant dense<0.000000e+00> : vector<8x512xf32>
    %68 = tpu.matmul %66, %67, %cst_33 {dimension_numbers = #tpu.dot_dimension_numbers<[1], [0], [0], [1], [0, 0, 1, 1], [], []>} : vector<8x128xbf16>, vector<128x512xbf16>, vector<8x512xf32> -> vector<8x512xf32>
    %69 = arith.addf %65, %68 : vector<8x512xf32>
    %c0_34 = arith.constant 0 : index
    %c0_35 = arith.constant 0 : index
    %70 = vector.load %arg7[%c0_34, %c0_35] : memref<1x512xf32, #tpu.memory_space<vmem>>, vector<1x512xf32>
    %71 = vector.broadcast %70 : vector<1x512xf32> to vector<8x512xf32>
    %72 = arith.addf %69, %71 : vector<8x512xf32>
    %73 = vector.extract_strided_slice %72 {offsets = [0, 0], sizes = [8, 384], strides = [1, 1]} : vector<8x512xf32> to vector<8x384xf32>
    %74 = arith.negf %73 : vector<8x384xf32>
    %75 = math.exp %74 : vector<8x384xf32>
    %cst_36 = arith.constant 1.000000e+00 : f32
    %76 = vector.broadcast %cst_36 : f32 to vector<8x384xf32>
    %77 = arith.addf %76, %75 : vector<8x384xf32>
    %78 = arith.divf %76, %77 : vector<8x384xf32>
    %79 = vector.extract_strided_slice %72 {offsets = [0, 384], sizes = [8, 128], strides = [1, 1]} : vector<8x512xf32> to vector<8x128xf32>
    %80 = math.tanh %79 : vector<8x128xf32>
    %81 = vector.extract_strided_slice %78 {offsets = [0, 0], sizes = [8, 128], strides = [1, 1]} : vector<8x384xf32> to vector<8x128xf32>
    %82 = vector.extract_strided_slice %78 {offsets = [0, 128], sizes = [8, 128], strides = [1, 1]} : vector<8x384xf32> to vector<8x128xf32>
    %83 = vector.extract_strided_slice %78 {offsets = [0, 256], sizes = [8, 128], strides = [1, 1]} : vector<8x384xf32> to vector<8x128xf32>
    %84 = arith.mulf %58, %82 : vector<8x128xf32>
    %85 = arith.mulf %81, %80 : vector<8x128xf32>
    %86 = arith.addf %84, %85 : vector<8x128xf32>
    %87 = math.tanh %86 : vector<8x128xf32>
    %88 = arith.mulf %83, %87 : vector<8x128xf32>
    %c3_i32 = arith.constant 3 : i32
    %89 = arith.index_cast %c3_i32 : i32 to index
    %c0_37 = arith.constant 0 : index
    %c0_38 = arith.constant 0 : index
    %90 = vector.load %arg2[%89, %c0_37, %c0_38] : memref<4x8x128xbf16, #tpu.memory_space<vmem>>, vector<1x8x128xbf16>
    %91 = vector.shape_cast %90 : vector<1x8x128xbf16> to vector<8x128xbf16>
    %c0_39 = arith.constant 0 : index
    %c0_40 = arith.constant 0 : index
    %92 = vector.load %arg5[%c0_39, %c0_40] : memref<128x512xbf16, #tpu.memory_space<vmem>>, vector<128x512xbf16>
    %cst_41 = arith.constant dense<0.000000e+00> : vector<8x512xf32>
    %93 = tpu.matmul %91, %92, %cst_41 {dimension_numbers = #tpu.dot_dimension_numbers<[1], [0], [0], [1], [0, 0, 1, 1], [], []>} : vector<8x128xbf16>, vector<128x512xbf16>, vector<8x512xf32> -> vector<8x512xf32>
    %94 = arith.truncf %88 : vector<8x128xf32> to vector<8x128xbf16>
    %c0_42 = arith.constant 0 : index
    %c0_43 = arith.constant 0 : index
    %95 = vector.load %arg6[%c0_42, %c0_43] : memref<128x512xbf16, #tpu.memory_space<vmem>>, vector<128x512xbf16>
    %cst_44 = arith.constant dense<0.000000e+00> : vector<8x512xf32>
    %96 = tpu.matmul %94, %95, %cst_44 {dimension_numbers = #tpu.dot_dimension_numbers<[1], [0], [0], [1], [0, 0, 1, 1], [], []>} : vector<8x128xbf16>, vector<128x512xbf16>, vector<8x512xf32> -> vector<8x512xf32>
    %97 = arith.addf %93, %96 : vector<8x512xf32>
    %c0_45 = arith.constant 0 : index
    %c0_46 = arith.constant 0 : index
    %98 = vector.load %arg7[%c0_45, %c0_46] : memref<1x512xf32, #tpu.memory_space<vmem>>, vector<1x512xf32>
    %99 = vector.broadcast %98 : vector<1x512xf32> to vector<8x512xf32>
    %100 = arith.addf %97, %99 : vector<8x512xf32>
    %101 = vector.extract_strided_slice %100 {offsets = [0, 0], sizes = [8, 384], strides = [1, 1]} : vector<8x512xf32> to vector<8x384xf32>
    %102 = arith.negf %101 : vector<8x384xf32>
    %103 = math.exp %102 : vector<8x384xf32>
    %cst_47 = arith.constant 1.000000e+00 : f32
    %104 = vector.broadcast %cst_47 : f32 to vector<8x384xf32>
    %105 = arith.addf %104, %103 : vector<8x384xf32>
    %106 = arith.divf %104, %105 : vector<8x384xf32>
    %107 = vector.extract_strided_slice %100 {offsets = [0, 384], sizes = [8, 128], strides = [1, 1]} : vector<8x512xf32> to vector<8x128xf32>
    %108 = math.tanh %107 : vector<8x128xf32>
    %109 = vector.extract_strided_slice %106 {offsets = [0, 0], sizes = [8, 128], strides = [1, 1]} : vector<8x384xf32> to vector<8x128xf32>
    %110 = vector.extract_strided_slice %106 {offsets = [0, 128], sizes = [8, 128], strides = [1, 1]} : vector<8x384xf32> to vector<8x128xf32>
    %111 = vector.extract_strided_slice %106 {offsets = [0, 256], sizes = [8, 128], strides = [1, 1]} : vector<8x384xf32> to vector<8x128xf32>
    %112 = arith.mulf %86, %110 : vector<8x128xf32>
    %113 = arith.mulf %109, %108 : vector<8x128xf32>
    %114 = arith.addf %112, %113 : vector<8x128xf32>
    %115 = math.tanh %114 : vector<8x128xf32>
    %116 = arith.mulf %111, %115 : vector<8x128xf32>
    %c4_i32 = arith.constant 4 : i32
    %c0_48 = arith.constant 0 : index
    %c0_49 = arith.constant 0 : index
    %117 = vector.load %arg10[%c0_48, %c0_49] : memref<8x128xf32, #tpu.memory_space<vmem>>, vector<8x128xf32>
    tpu.vector_store %arg10[%c0_48, %c0_49], %116 {strides = array<i32>} : memref<8x128xf32, #tpu.memory_space<vmem>>, vector<8x128xf32>,
    %c0_50 = arith.constant 0 : index
    %c0_51 = arith.constant 0 : index
    %118 = vector.load %arg11[%c0_50, %c0_51] : memref<8x128xf32, #tpu.memory_space<vmem>>, vector<8x128xf32>
    tpu.vector_store %arg11[%c0_50, %c0_51], %114 {strides = array<i32>} : memref<8x128xf32, #tpu.memory_space<vmem>>, vector<8x128xf32>,
    %c1_i32_52 = arith.constant 1 : i32
    %119 = arith.cmpi eq, %arg1, %c1_i32_52 : i32
    %120 = arith.extui %119 : i1 to i32
    %c0_i32_53 = arith.constant 0 : i32
    %121 = arith.cmpi ne, %120, %c0_i32_53 : i32
    scf.if %121 {
      %c0_54 = arith.constant 0 : index
      %c0_55 = arith.constant 0 : index
      %122 = vector.load %arg8[%c0_54, %c0_55] : memref<8x128xf32, #tpu.memory_space<vmem>>, vector<8x128xf32>
      tpu.vector_store %arg8[%c0_54, %c0_55], %116 {strides = array<i32>} : memref<8x128xf32, #tpu.memory_space<vmem>>, vector<8x128xf32>,
      %c0_56 = arith.constant 0 : index
      %c0_57 = arith.constant 0 : index
      %123 = vector.load %arg9[%c0_56, %c0_57] : memref<8x128xf32, #tpu.memory_space<vmem>>, vector<8x128xf32>
      tpu.vector_store %arg9[%c0_56, %c0_57], %114 {strides = array<i32>} : memref<8x128xf32, #tpu.memory_space<vmem>>, vector<8x128xf32>,
    } else {
    }
    return
  }
  func.func @transform_0(%arg0: i32, %arg1: i32) -> (i32, i32, i32) {
    %c0_i32 = arith.constant 0 : i32
    %c0_i32_0 = arith.constant 0 : i32
    return %arg1, %arg0, %c0_i32 : i32, i32, i32
  }
  func.func @transform_1(%arg0: i32, %arg1: i32) -> (i32, i32) {
    %c0_i32 = arith.constant 0 : i32
    %c0_i32_0 = arith.constant 0 : i32
    return %arg0, %c0_i32 : i32, i32
  }
  func.func @transform_2(%arg0: i32, %arg1: i32) -> (i32, i32) {
    %c0_i32 = arith.constant 0 : i32
    %c0_i32_0 = arith.constant 0 : i32
    return %arg0, %c0_i32 : i32, i32
  }
  func.func @transform_3(%arg0: i32, %arg1: i32) -> (i32, i32) {
    %c0_i32 = arith.constant 0 : i32
    %c0_i32_0 = arith.constant 0 : i32
    %c0_i32_1 = arith.constant 0 : i32
    return %c0_i32, %c0_i32_0 : i32, i32
  }
  func.func @transform_4(%arg0: i32, %arg1: i32) -> (i32, i32) {
    %c0_i32 = arith.constant 0 : i32
    %c0_i32_0 = arith.constant 0 : i32
    %c0_i32_1 = arith.constant 0 : i32
    return %c0_i32, %c0_i32_0 : i32, i32
  }
  func.func @transform_5(%arg0: i32, %arg1: i32) -> (i32, i32) {
    %c0_i32 = arith.constant 0 : i32
    %c0_i32_0 = arith.constant 0 : i32
    %c0_i32_1 = arith.constant 0 : i32
    return %c0_i32, %c0_i32_0 : i32, i32
  }
  func.func @transform_6(%arg0: i32, %arg1: i32) -> (i32, i32) {
    %c0_i32 = arith.constant 0 : i32
    %c0_i32_0 = arith.constant 0 : i32
    return %arg0, %c0_i32 : i32, i32
  }
  func.func @transform_7(%arg0: i32, %arg1: i32) -> (i32, i32) {
    %c0_i32 = arith.constant 0 : i32
    %c0_i32_0 = arith.constant 0 : i32
    return %arg0, %c0_i32 : i32, i32
  }
}

</mosaic_0001>

<llo_original>
// kernel: tpu_custom_call.1
$region0: #{tpu_custom_call.1}
  #allocation0 [shape = 'u32[]', space=smem, size = 0x4, offset = 0x4, fixed_abs, tag = 'smem constant byte address 0x4 - core index']
  #allocation1 [shape = 'u32[144,128]{1,0:T(1,128)}', space=vmem, size = 0x12000, scoped, tag = 'internal scratch']
  #allocation2 [shape = 'f32[8,128]{1,0:T(8,128)}', space=vmem, size = 0x1000, scoped, tag = 'scratch operand']
  #allocation3 [shape = 'f32[8,128]{1,0:T(8,128)}', space=vmem, size = 0x1000, scoped, tag = 'scratch operand']
  %s0 = inlined_call_operand.hbm [shape: bf16[8,8,128], index: 0, kind: input, shape index: {}]
  %s1 = inlined_call_operand.hbm [shape: f32[8,128], index: 1, kind: input, shape index: {}]
  %s2 = inlined_call_operand.hbm [shape: f32[8,128], index: 2, kind: input, shape index: {}]
  %s3 = inlined_call_operand.hbm [shape: bf16[128,512], index: 3, kind: input, shape index: {}]
  %s4 = inlined_call_operand.hbm [shape: bf16[128,512], index: 4, kind: input, shape index: {}]
  %s5 = inlined_call_operand.vmem [shape: f32[1,512], index: 5, kind: input, shape index: {}]
  %s6 = inlined_call_operand.hbm [shape: f32[8,128], index: 6, kind: output, shape index: {0}]
  %s7 = inlined_call_operand.hbm [shape: f32[8,128], index: 7, kind: output, shape index: {1}]
  %8 = xla_tuple %s6, %s7
  %s9 = sld [smem:[#allocation0]]
  $region93: #{tpu_custom_call.1} parent=0
    _
  %s11 = ssub.s32 1, %s9
  %s12 = scalar_select 0, %s11, %s9
  $region1: #{tpu_custom_call.1} parent=0
    #allocation4 [shape = 'u8[16384]{0}', space=vmem, size = 0x4000, scoped, tag = 'input window, operand 0']
    #allocation5 [shape = 's32[2]{0}', space=sflag, size = 0x8, scoped, tag = 'scoped memory for tpu_custom_call.1']
    #allocation6 [shape = 's32[2]{0}', space=sflag, size = 0x8, scoped, tag = 'scoped memory for tpu_custom_call.1']
    #allocation7 [shape = 'u8[4096]{0}', space=vmem, size = 0x1000, scoped, tag = 'input window, operand 1, single buffered']
    #allocation8 [shape = 's32[1]{0}', space=sflag, size = 0x4, scoped, tag = 'scoped memory for tpu_custom_call.1']
    #allocation9 [shape = 'u8[4096]{0}', space=vmem, size = 0x1000, scoped, tag = 'input window, operand 2, single buffered']
    #allocation10 [shape = 'u8[131072]{0}', space=vmem, size = 0x20000, scoped, tag = 'input window, operand 3, single buffered']
    #allocation11 [shape = 's32[1]{0}', space=sflag, size = 0x4, scoped, tag = 'scoped memory for tpu_custom_call.1']
    #allocation12 [shape = 'u8[131072]{0}', space=vmem, size = 0x20000, scoped, tag = 'input window, operand 4, single buffered']
    #allocation13 [shape = 'u8[4096]{0}', space=vmem, size = 0x1000, scoped, tag = 'output window, operand 0, single buffered']
    #allocation14 [shape = 'u8[4096]{0}', space=vmem, size = 0x1000, scoped, tag = 'output window, operand 1, single buffered']
    #allocation15 [shape = 's32[1]{0}', space=sflag, size = 0x4, scoped, tag = 'scoped memory for tpu_custom_call.1']
    %13 = vsyncpa [#allocation5], 0
    %s14 = scalar_lea.sflag [#allocation5], 1
    %15 = vsyncpa %s14, 0
    %16 = vsyncpa [#allocation8], 0
    %17 = vsyncpa [#allocation11], 0
    %18 = vsyncpa [#allocation6], 0
    %19 = vsyncpa [#allocation15], 0
    loop: start=0, step=1, limit=4
    $region2: #{tpu_custom_call.1} parent=1 // loop_pre_header
      _
    $region3: #{tpu_custom_call.1} parent=1 // loop_header
      %s21 = sphi 0, %s25
      %p22 = scmp.ge.s32.totalorder %s21, 4
      %s28 = sphi 0, %s40
      %s29 = sphi 0, %s36
      %s30 = sphi 0, %s28
      %s31 = sphi 0, %s29
      %s32 = sphi 0, %s30
      %s33 = sphi 0, %s31
      %s45 = sphi 0, %s47
      %s48 = sphi 0, %s45
      %s49 = sphi 0, %s48
      %s65 = sphi 0, %s49
      %s71 = sphi 0, %s73
      %s74 = sphi 0, %s71
      %s75 = sphi 0, %s74
      %s91 = sphi 0, %s75
      %s97 = sphi 0, %s99
      %s100 = sphi 0, %s97
      %s101 = sphi 0, %s100
      %s117 = sphi 0, %s101
      %s121 = sphi 0, %s121
      %s123 = sphi 0, %s121
      %s124 = sphi 0, %s123
      %s138 = sphi 0, %s124
      %s142 = sphi 0, %s142
      %s144 = sphi 0, %s142
      %s145 = sphi 0, %s144
      %s159 = sphi 0, %s145
      %s163 = sphi 0, %s163
      %s165 = sphi 0, %s163
      %s166 = sphi 0, %s165
      %s180 = sphi 0, %s166
      %s186 = sphi 0, %s188
      %s189 = sphi 0, %s186
      %s190 = sphi 0, %s189
      %s206 = sphi 0, %s190
      %s212 = sphi 0, %s214
      %s215 = sphi 0, %s212
      %s216 = sphi 0, %s215
      %s232 = sphi 0, %s216
    $region4: #{tpu_custom_call.1} parent=1 // loop_header_branch
      %24 = sbr.rel (%p22) target = $region8
    $region5: #{tpu_custom_call.1} parent=1 // loop_body
      %s26 = ssub.s32 %s21, 1
      %s27 = ssub.s32 %s21, 2
      %s34 = sadd.s32 1, %s29
      %p35 = scmp.ge.s32.totalorder %s34, 2
      %s36 = scalar_select %p35, 0, %s34
      %s37 = sadd.s32 1, %s28
      %s38 = scalar_select %p35, %s37, %s28
      %p39 = scmp.ge.s32.totalorder %s38, 1
      %s40 = scalar_select %p39, 0, %s38
      %s41 = ssub.s32 %s29, %s36
      %s42 = ssub.s32 %s28, %s40
      %s43 = sor.u32 %s41, %s42
      %p44 = scmp.eq.s32.totalorder %s43, 0
      %s46 = sadd.s32 %s45, 1
      %s47 = scalar_select %p44, %s45, %s46
      %p50 = pneg %p44
      %p51 = scmp.eq.s32.totalorder %s21, 1
      %p52 = por %p50, %p51
      %p53 = scmp.ne.s32.totalorder %s45, %s48
      %p54 = scmp.eq.s32.totalorder %s21, 0
      %p55 = por %p53, %p54
      %p56 = scmp.ne.s32.totalorder %s45, %s48
      %p57 = scmp.eq.s32.totalorder %s26, 1
      %p58 = por %p56, %p57
      %p59 = scmp.ne.s32.totalorder %s48, %s49
      %p60 = scmp.eq.s32.totalorder %s26, 0
      %p61 = por %p59, %p60
      %p62 = scmp.ne.s32.totalorder %s48, %s49
      %p63 = scmp.eq.s32.totalorder %s27, 1
      %p64 = por %p62, %p63
      %p66 = scmp.ne.s32.totalorder %s49, %s65
      %p67 = scmp.eq.s32.totalorder %s27, 0
      %p68 = por %p66, %p67
      %s69 = ssub.s32 %s28, %s40
      %p70 = scmp.eq.s32.totalorder %s69, 0
      %s72 = sadd.s32 %s71, 1
      %s73 = scalar_select %p70, %s71, %s72
      %p76 = pneg %p70
      %p77 = scmp.eq.s32.totalorder %s21, 1
      %p78 = por %p76, %p77
      %p79 = scmp.ne.s32.totalorder %s71, %s74
      %p80 = scmp.eq.s32.totalorder %s21, 0
      %p81 = por %p79, %p80
      %p82 = scmp.ne.s32.totalorder %s71, %s74
      %p83 = scmp.eq.s32.totalorder %s26, 1
      %p84 = por %p82, %p83
      %p85 = scmp.ne.s32.totalorder %s74, %s75
      %p86 = scmp.eq.s32.totalorder %s26, 0
      %p87 = por %p85, %p86
      %p88 = scmp.ne.s32.totalorder %s74, %s75
      %p89 = scmp.eq.s32.totalorder %s27, 1
      %p90 = por %p88, %p89
      %p92 = scmp.ne.s32.totalorder %s75, %s91
      %p93 = scmp.eq.s32.totalorder %s27, 0
      %p94 = por %p92, %p93
      %s95 = ssub.s32 %s28, %s40
      %p96 = scmp.eq.s32.totalorder %s95, 0
      %s98 = sadd.s32 %s97, 1
      %s99 = scalar_select %p96, %s97, %s98
      %p102 = pneg %p96
      %p103 = scmp.eq.s32.totalorder %s21, 1
      %p104 = por %p102, %p103
      %p105 = scmp.ne.s32.totalorder %s97, %s100
      %p106 = scmp.eq.s32.totalorder %s21, 0
      %p107 = por %p105, %p106
      %p108 = scmp.ne.s32.totalorder %s97, %s100
      %p109 = scmp.eq.s32.totalorder %s26, 1
      %p110 = por %p108, %p109
      %p111 = scmp.ne.s32.totalorder %s100, %s101
      %p112 = scmp.eq.s32.totalorder %s26, 0
      %p113 = por %p111, %p112
      %p114 = scmp.ne.s32.totalorder %s100, %s101
      %p115 = scmp.eq.s32.totalorder %s27, 1
      %p116 = por %p114, %p115
      %p118 = scmp.ne.s32.totalorder %s101, %s117
      %p119 = scmp.eq.s32.totalorder %s27, 0
      %p120 = por %p118, %p119
      %s122 = sadd.s32 %s121, 1
      %p125 = scmp.eq.s32.totalorder %s21, 1
      %p126 = scmp.ne.s32.totalorder %s121, %s123
      %p127 = scmp.eq.s32.totalorder %s21, 0
      %p128 = por %p126, %p127
      %p129 = scmp.ne.s32.totalorder %s121, %s123
      %p130 = scmp.eq.s32.totalorder %s26, 1
      %p131 = por %p129, %p130
      %p132 = scmp.ne.s32.totalorder %s123, %s124
      %p133 = scmp.eq.s32.totalorder %s26, 0
      %p134 = por %p132, %p133
      %p135 = scmp.ne.s32.totalorder %s123, %s124
      %p136 = scmp.eq.s32.totalorder %s27, 1
      %p137 = por %p135, %p136
      %p139 = scmp.ne.s32.totalorder %s124, %s138
      %p140 = scmp.eq.s32.totalorder %s27, 0
      %p141 = por %p139, %p140
      %s143 = sadd.s32 %s142, 1
      %p146 = scmp.eq.s32.totalorder %s21, 1
      %p147 = scmp.ne.s32.totalorder %s142, %s144
      %p148 = scmp.eq.s32.totalorder %s21, 0
      %p149 = por %p147, %p148
      %p150 = scmp.ne.s32.totalorder %s142, %s144
      %p151 = scmp.eq.s32.totalorder %s26, 1
      %p152 = por %p150, %p151
      %p153 = scmp.ne.s32.totalorder %s144, %s145
      %p154 = scmp.eq.s32.totalorder %s26, 0
      %p155 = por %p153, %p154
      %p156 = scmp.ne.s32.totalorder %s144, %s145
      %p157 = scmp.eq.s32.totalorder %s27, 1
      %p158 = por %p156, %p157
      %p160 = scmp.ne.s32.totalorder %s145, %s159
      %p161 = scmp.eq.s32.totalorder %s27, 0
      %p162 = por %p160, %p161
      %s164 = sadd.s32 %s163, 1
      %p167 = scmp.eq.s32.totalorder %s21, 1
      %p168 = scmp.ne.s32.totalorder %s163, %s165
      %p169 = scmp.eq.s32.totalorder %s21, 0
      %p170 = por %p168, %p169
      %p171 = scmp.ne.s32.totalorder %s163, %s165
      %p172 = scmp.eq.s32.totalorder %s26, 1
      %p173 = por %p171, %p172
      %p174 = scmp.ne.s32.totalorder %s165, %s166
      %p175 = scmp.eq.s32.totalorder %s26, 0
      %p176 = por %p174, %p175
      %p177 = scmp.ne.s32.totalorder %s165, %s166
      %p178 = scmp.eq.s32.totalorder %s27, 1
      %p179 = por %p177, %p178
      %p181 = scmp.ne.s32.totalorder %s166, %s180
      %p182 = scmp.eq.s32.totalorder %s27, 0
      %p183 = por %p181, %p182
      %s184 = ssub.s32 %s28, %s40
      %p185 = scmp.eq.s32.totalorder %s184, 0
      %s187 = sadd.s32 %s186, 1
      %s188 = scalar_select %p185, %s186, %s187
      %p191 = pneg %p185
      %p192 = scmp.eq.s32.totalorder %s21, 1
      %p193 = por %p191, %p192
      %p194 = scmp.ne.s32.totalorder %s186, %s189
      %p195 = scmp.eq.s32.totalorder %s21, 0
      %p196 = por %p194, %p195
      %p197 = scmp.ne.s32.totalorder %s186, %s189
      %p198 = scmp.eq.s32.totalorder %s26, 1
      %p199 = por %p197, %p198
      %p200 = scmp.ne.s32.totalorder %s189, %s190
      %p201 = scmp.eq.s32.totalorder %s26, 0
      %p202 = por %p200, %p201
      %p203 = scmp.ne.s32.totalorder %s189, %s190
      %p204 = scmp.eq.s32.totalorder %s27, 1
      %p205 = por %p203, %p204
      %p207 = scmp.ne.s32.totalorder %s190, %s206
      %p208 = scmp.eq.s32.totalorder %s27, 0
      %p209 = por %p207, %p208
      %s210 = ssub.s32 %s28, %s40
      %p211 = scmp.eq.s32.totalorder %s210, 0
      %s213 = sadd.s32 %s212, 1
      %s214 = scalar_select %p211, %s212, %s213
      %p217 = pneg %p211
      %p218 = scmp.eq.s32.totalorder %s21, 1
      %p219 = por %p217, %p218
      %p220 = scmp.ne.s32.totalorder %s212, %s215
      %p221 = scmp.eq.s32.totalorder %s21, 0
      %p222 = por %p220, %p221
      %p223 = scmp.ne.s32.totalorder %s212, %s215
      %p224 = scmp.eq.s32.totalorder %s26, 1
      %p225 = por %p223, %p224
      %p226 = scmp.ne.s32.totalorder %s215, %s216
      %p227 = scmp.eq.s32.totalorder %s26, 0
      %p228 = por %p226, %p227
      %p229 = scmp.ne.s32.totalorder %s215, %s216
      %p230 = scmp.eq.s32.totalorder %s27, 1
      %p231 = por %p229, %p230
      %p233 = scmp.ne.s32.totalorder %s216, %s232
      %p234 = scmp.eq.s32.totalorder %s27, 0
      %p235 = por %p233, %p234
      %p236 = scmp.le.s32.totalorder 1, %s21
      %p237 = scmp.lt.s32.totalorder %s21, 3
      %p238 = pnand %p236, %p237
      %p239 = pneg %p238
      // Predicated region
      $region9: #{tpu_custom_call.1} parent=5 // pred_check
        _
      $region10: #{tpu_custom_call.1} parent=5 // pred_check_branch
        %241 = sbr.rel (%p238) target = $region12
      $region11: #{tpu_custom_call.1} parent=5 // pred_region
        %s242 = ssub.s32 %s21, 1
        // Predicated region
        $region13: #{tpu_custom_call.1} parent=11 // pred_check
          %p243 = pneg %p87
        $region14: #{tpu_custom_call.1} parent=11 // pred_check_branch
          %245 = sbr.rel (%p243) target = $region16
        $region15: #{tpu_custom_call.1} parent=11 // pred_region
          %s247 = ssub.s32 128, 128
          %248 = vsyncadd [#allocation8], %s247
          %s249 = smul.addr %s30, 128
          %s250 = scalar_lea.hbm %s1, %s249
          %s252 = sshll.u32 [#allocation7], 4
          %s253 = int_to_ptr.vmem [resolvable:$true] %s252
          %255 = dma.hbm_to_vmem [thread:$0]  %s250, 128, %s253, [#allocation8]
        $region16: #{tpu_custom_call.1} parent=11 // pred_fallthru
          _
        // Predicated region
        $region17: #{tpu_custom_call.1} parent=11 // pred_check
          %p256 = pneg %p113
        $region18: #{tpu_custom_call.1} parent=11 // pred_check_branch
          %258 = sbr.rel (%p256) target = $region20
        $region19: #{tpu_custom_call.1} parent=11 // pred_region
          %s260 = ssub.s32 128, 128
          %261 = vsyncadd [#allocation8], %s260
          %s262 = smul.addr %s30, 128
          %s263 = scalar_lea.hbm %s2, %s262
          %s265 = sshll.u32 [#allocation9], 4
          %s266 = int_to_ptr.vmem [resolvable:$true] %s265
          %268 = dma.hbm_to_vmem [thread:$0]  %s263, 128, %s266, [#allocation8]
        $region20: #{tpu_custom_call.1} parent=11 // pred_fallthru
          _
        // Predicated region
        $region21: #{tpu_custom_call.1} parent=11 // pred_check
          %p269 = pneg %p134
        $region22: #{tpu_custom_call.1} parent=11 // pred_check_branch
          %271 = sbr.rel (%p269) target = $region24
        $region23: #{tpu_custom_call.1} parent=11 // pred_region
          %s273 = ssub.s32 4096, 4096
          %274 = vsyncadd [#allocation11], %s273
          %s275 = sshll.u32 [#allocation10], 4
          %s276 = int_to_ptr.vmem [resolvable:$true] %s275
          %281 = dma.hbm_to_vmem [thread:$0]  %s3, 4096, %s276, [#allocation11], 256, 256, 16
        $region24: #{tpu_custom_call.1} parent=11 // pred_fallthru
          _
        // Predicated region
        $region25: #{tpu_custom_call.1} parent=11 // pred_check
          %p282 = pneg %p155
        $region26: #{tpu_custom_call.1} parent=11 // pred_check_branch
          %284 = sbr.rel (%p282) target = $region28
        $region27: #{tpu_custom_call.1} parent=11 // pred_region
          %s286 = ssub.s32 4096, 4096
          %287 = vsyncadd [#allocation11], %s286
          %s288 = sshll.u32 [#allocation12], 4
          %s289 = int_to_ptr.vmem [resolvable:$true] %s288
          %294 = dma.hbm_to_vmem [thread:$0]  %s4, 4096, %s289, [#allocation11], 256, 256, 16
        $region28: #{tpu_custom_call.1} parent=11 // pred_fallthru
          _
        // Predicated region
        $region29: #{tpu_custom_call.1} parent=11 // pred_check
          %p295 = pneg %p176
        $region30: #{tpu_custom_call.1} parent=11 // pred_check_branch
          %297 = sbr.rel (%p295) target = $region32
        $region31: #{tpu_custom_call.1} parent=11 // pred_region
          _
        $region32: #{tpu_custom_call.1} parent=11 // pred_fallthru
          _
      $region12: #{tpu_custom_call.1} parent=5 // pred_fallthru
        _
      %p298 = scmp.lt.s32.totalorder %s21, 2
      // Predicated region
      $region33: #{tpu_custom_call.1} parent=5 // pred_check
        %p299 = pneg %p298
      $region34: #{tpu_custom_call.1} parent=5 // pred_check_branch
        %301 = sbr.rel (%p299) target = $region36
      $region35: #{tpu_custom_call.1} parent=5 // pred_region
        // Predicated region
        $region37: #{tpu_custom_call.1} parent=35 // pred_check
          %p302 = pneg %p55
        $region38: #{tpu_custom_call.1} parent=35 // pred_check_branch
          %304 = sbr.rel (%p302) target = $region40
        $region39: #{tpu_custom_call.1} parent=35 // pred_region
          %s305 = sand.u32 %s45, 1
          %s306 = scalar_lea.sflag [#allocation5], %s305
          %s307 = sand.u32 %s45, 1
          %s308 = smul.addr %s307, 16
          %s309 = scalar_lea.vmem [#allocation4], %s308
          %s310 = smul.u32 4, %s29
          %s312 = ssub.s32 256, 256
          %313 = vsyncadd %s306, %s312
          %s314 = sadd.s32 %s28, %s310
          %s315 = smul.addr %s314, 64
          %s316 = scalar_lea.hbm %s0, %s315
          %s317 = sshll.u32 %s309, 4
          %s318 = int_to_ptr.vmem [resolvable:$true] %s317
          %323 = dma.hbm_to_vmem [thread:$0]  %s316, 256, %s318, %s306, 64, 64, 4
        $region40: #{tpu_custom_call.1} parent=35 // pred_fallthru
          _
      $region36: #{tpu_custom_call.1} parent=5 // pred_fallthru
        _
      %p324 = scmp.le.s32.totalorder 1, %s21
      %p325 = scmp.lt.s32.totalorder %s21, 3
      %p326 = pnand %p324, %p325
      %p327 = pneg %p326
      // Predicated region
      $region41: #{tpu_custom_call.1} parent=5 // pred_check
        _
      $region42: #{tpu_custom_call.1} parent=5 // pred_check_branch
        %329 = sbr.rel (%p326) target = $region44
      $region43: #{tpu_custom_call.1} parent=5 // pred_region
        %s330 = ssub.s32 %s21, 1
        %s331 = sand.u32 %s48, 1
        %s332 = scalar_lea.sflag [#allocation5], %s331
        %s333 = sand.u32 %s48, 1
        %s334 = smul.addr %s333, 16
        %s335 = scalar_lea.vmem [#allocation4], %s334
        // Predicated region
        $region45: #{tpu_custom_call.1} parent=43 // pred_check
          %p336 = pneg %p61
        $region46: #{tpu_custom_call.1} parent=43 // pred_check_branch
          %338 = sbr.rel (%p336) target = $region48
        $region47: #{tpu_custom_call.1} parent=43 // pred_region
          %339 = dma.done %s332, 256
        $region48: #{tpu_custom_call.1} parent=43 // pred_fallthru
          _
        // Predicated region
        $region49: #{tpu_custom_call.1} parent=43 // pred_check
          %p340 = pneg %p87
        $region50: #{tpu_custom_call.1} parent=43 // pred_check_branch
          %342 = sbr.rel (%p340) target = $region52
        $region51: #{tpu_custom_call.1} parent=43 // pred_region
          %343 = dma.done [#allocation8], 128
        $region52: #{tpu_custom_call.1} parent=43 // pred_fallthru
          _
        // Predicated region
        $region53: #{tpu_custom_call.1} parent=43 // pred_check
          %p344 = pneg %p113
        $region54: #{tpu_custom_call.1} parent=43 // pred_check_branch
          %346 = sbr.rel (%p344) target = $region56
        $region55: #{tpu_custom_call.1} parent=43 // pred_region
          %347 = dma.done [#allocation8], 128
        $region56: #{tpu_custom_call.1} parent=43 // pred_fallthru
          _
        // Predicated region
        $region57: #{tpu_custom_call.1} parent=43 // pred_check
          %p348 = pneg %p134
        $region58: #{tpu_custom_call.1} parent=43 // pred_check_branch
          %350 = sbr.rel (%p348) target = $region60
        $region59: #{tpu_custom_call.1} parent=43 // pred_region
          %351 = dma.done [#allocation11], 4096
        $region60: #{tpu_custom_call.1} parent=43 // pred_fallthru
          _
        // Predicated region
        $region61: #{tpu_custom_call.1} parent=43 // pred_check
          %p352 = pneg %p155
        $region62: #{tpu_custom_call.1} parent=43 // pred_check_branch
          %354 = sbr.rel (%p352) target = $region64
        $region63: #{tpu_custom_call.1} parent=43 // pred_region
          %355 = dma.done [#allocation11], 4096
        $region64: #{tpu_custom_call.1} parent=43 // pred_fallthru
          _
        %s356 = sand.u32 %s48, 1
        %s357 = scalar_lea.sflag [#allocation5], %s356
        %s358 = sand.u32 %s48, 1
        %s359 = smul.addr %s358, 16
        %s360 = scalar_lea.vmem [#allocation4], %s359
        %p361 = pneg %p61
        %p362 = pneg %p58
        %p363 = pneg %p87
        %p364 = pneg %p84
        %p365 = pneg %p113
        %p366 = pneg %p110
        %p367 = pneg %p134
        %p368 = pneg %p131
        %p369 = pneg %p155
        %p370 = pneg %p152
        %p371 = pneg %p176
        %p372 = pneg %p173
        %p373 = pneg %p202
        %p374 = pneg %p199
        %p375 = pneg %p228
        %p376 = pneg %p225
        %s377 = smul.u32 4, %s31
        %p379 = scmp.eq.s32.totalorder %s31, 0
        // Predicated region
        $region65: #{tpu_custom_call.1} parent=43 // pred_check
          %p380 = pneg %p379
        $region66: #{tpu_custom_call.1} parent=43 // pred_check_branch
          %382 = sbr.rel (%p380) target = $region68
        $region67: #{tpu_custom_call.1} parent=43 // pred_region
          %v383 = vld [vmem:[#allocation7] sm:$0xff]
          %384 = vst [vmem:[#allocation2] sm:$0xff] %v383
          %v385 = vld [vmem:[#allocation9] sm:$0xff]
          %386 = vst [vmem:[#allocation3] sm:$0xff] %v385
        $region68: #{tpu_custom_call.1} parent=43 // pred_fallthru
          _
        %v387 = vld [vmem:[#allocation2] sm:$0xff]
        %v388 = vld [vmem:[#allocation3] sm:$0xff]
        %v389 = vld [vmem:[%s335] sm:$0xf]
        %v390 = vld [vmem:[#allocation10] sm:$0xff]
        %v391 = vld [vmem:[#allocation10 + $0x8] sm:$0xff]
        %v392 = vld [vmem:[#allocation10 + $0x10] sm:$0xff]
        %v393 = vld [vmem:[#allocation10 + $0x18] sm:$0xff]
        %v394 = vld [vmem:[#allocation10 + $0x20] sm:$0xff]
        %v395 = vld [vmem:[#allocation10 + $0x28] sm:$0xff]
        %v396 = vld [vmem:[#allocation10 + $0x30] sm:$0xff]
        %v397 = vld [vmem:[#allocation10 + $0x38] sm:$0xff]
        %v398 = vld [vmem:[#allocation10 + $0x40] sm:$0xff]
        %v399 = vld [vmem:[#allocation10 + $0x48] sm:$0xff]
        %v400 = vld [vmem:[#allocation10 + $0x50] sm:$0xff]
        %v401 = vld [vmem:[#allocation10 + $0x58] sm:$0xff]
        %v402 = vld [vmem:[#allocation10 + $0x60] sm:$0xff]
        %v403 = vld [vmem:[#allocation10 + $0x68] sm:$0xff]
        %v404 = vld [vmem:[#allocation10 + $0x70] sm:$0xff]
        %v405 = vld [vmem:[#allocation10 + $0x78] sm:$0xff]
        %v406 = vld [vmem:[#allocation10 + $0x80] sm:$0xff]
        %v407 = vld [vmem:[#allocation10 + $0x88] sm:$0xff]
        %v408 = vld [vmem:[#allocation10 + $0x90] sm:$0xff]
        %v409 = vld [vmem:[#allocation10 + $0x98] sm:$0xff]
        %v410 = vld [vmem:[#allocation10 + $0xa0] sm:$0xff]
        %v411 = vld [vmem:[#allocation10 + $0xa8] sm:$0xff]
        %v412 = vld [vmem:[#allocation10 + $0xb0] sm:$0xff]
        %v413 = vld [vmem:[#allocation10 + $0xb8] sm:$0xff]
        %v414 = vld [vmem:[#allocation10 + $0xc0] sm:$0xff]
        %v415 = vld [vmem:[#allocation10 + $0xc8] sm:$0xff]
        %v416 = vld [vmem:[#allocation10 + $0xd0] sm:$0xff]
        %v417 = vld [vmem:[#allocation10 + $0xd8] sm:$0xff]
        %v418 = vld [vmem:[#allocation10 + $0xe0] sm:$0xff]
        %v419 = vld [vmem:[#allocation10 + $0xe8] sm:$0xff]
        %v420 = vld [vmem:[#allocation10 + $0xf0] sm:$0xff]
        %v421 = vld [vmem:[#allocation10 + $0xf8] sm:$0xff]
        %v422 = vpack.c.bf16 %v387, %v387
        %v423 = vld [vmem:[#allocation12] sm:$0xff]
        %v424 = vld [vmem:[#allocation12 + $0x8] sm:$0xff]
        %v425 = vld [vmem:[#allocation12 + $0x10] sm:$0xff]
        %v426 = vld [vmem:[#allocation12 + $0x18] sm:$0xff]
        %v427 = vld [vmem:[#allocation12 + $0x20] sm:$0xff]
        %v428 = vld [vmem:[#allocation12 + $0x28] sm:$0xff]
        %v429 = vld [vmem:[#allocation12 + $0x30] sm:$0xff]
        %v430 = vld [vmem:[#allocation12 + $0x38] sm:$0xff]
        %v431 = vld [vmem:[#allocation12 + $0x40] sm:$0xff]
        %v432 = vld [vmem:[#allocation12 + $0x48] sm:$0xff]
        %v433 = vld [vmem:[#allocation12 + $0x50] sm:$0xff]
        %v434 = vld [vmem:[#allocation12 + $0x58] sm:$0xff]
        %v435 = vld [vmem:[#allocation12 + $0x60] sm:$0xff]
        %v436 = vld [vmem:[#allocation12 + $0x68] sm:$0xff]
        %v437 = vld [vmem:[#allocation12 + $0x70] sm:$0xff]
        %v438 = vld [vmem:[#allocation12 + $0x78] sm:$0xff]
        %v439 = vld [vmem:[#allocation12 + $0x80] sm:$0xff]
        %v440 = vld [vmem:[#allocation12 + $0x88] sm:$0xff]
        %v441 = vld [vmem:[#allocation12 + $0x90] sm:$0xff]
        %v442 = vld [vmem:[#allocation12 + $0x98] sm:$0xff]
        %v443 = vld [vmem:[#allocation12 + $0xa0] sm:$0xff]
        %v444 = vld [vmem:[#allocation12 + $0xa8] sm:$0xff]
        %v445 = vld [vmem:[#allocation12 + $0xb0] sm:$0xff]
        %v446 = vld [vmem:[#allocation12 + $0xb8] sm:$0xff]
        %v447 = vld [vmem:[#allocation12 + $0xc0] sm:$0xff]
        %v448 = vld [vmem:[#allocation12 + $0xc8] sm:$0xff]
        %v449 = vld [vmem:[#allocation12 + $0xd0] sm:$0xff]
        %v450 = vld [vmem:[#allocation12 + $0xd8] sm:$0xff]
        %v451 = vld [vmem:[#allocation12 + $0xe0] sm:$0xff]
        %v452 = vld [vmem:[#allocation12 + $0xe8] sm:$0xff]
        %v453 = vld [vmem:[#allocation12 + $0xf0] sm:$0xff]
        %v454 = vld [vmem:[#allocation12 + $0xf8] sm:$0xff]
        %v487 = vunpack.c.l.b16 %v423
        %v488 = vunpack.c.h.b16 %v423
        %v489 = vunpack.c.l.b16 %v424
        %v490 = vunpack.c.h.b16 %v424
        %v491 = vunpack.c.l.b16 %v425
        %v492 = vunpack.c.h.b16 %v425
        %v493 = vunpack.c.l.b16 %v426
        %v494 = vunpack.c.h.b16 %v426
        %v495 = vunpack.c.l.b16 %v427
        %v496 = vunpack.c.h.b16 %v427
        %v497 = vunpack.c.l.b16 %v428
        %v498 = vunpack.c.h.b16 %v428
        %v499 = vunpack.c.l.b16 %v429
        %v500 = vunpack.c.h.b16 %v429
        %v501 = vunpack.c.l.b16 %v430
        %v502 = vunpack.c.h.b16 %v430
        %v503 = vunpack.c.l.b16 %v431
        %v504 = vunpack.c.h.b16 %v431
        %v505 = vunpack.c.l.b16 %v432
        %v506 = vunpack.c.h.b16 %v432
        %v507 = vunpack.c.l.b16 %v433
        %v508 = vunpack.c.h.b16 %v433
        %v509 = vunpack.c.l.b16 %v434
        %v510 = vunpack.c.h.b16 %v434
        %v511 = vunpack.c.l.b16 %v435
        %v512 = vunpack.c.h.b16 %v435
        %v513 = vunpack.c.l.b16 %v436
        %v514 = vunpack.c.h.b16 %v436
        %v515 = vunpack.c.l.b16 %v437
        %v516 = vunpack.c.h.b16 %v437
        %v517 = vunpack.c.l.b16 %v438
        %v518 = vunpack.c.h.b16 %v438
        %v519 = vunpack.c.l.b16 %v439
        %v520 = vunpack.c.h.b16 %v439
        %v521 = vunpack.c.l.b16 %v440
        %v522 = vunpack.c.h.b16 %v440
        %v523 = vunpack.c.l.b16 %v441
        %v524 = vunpack.c.h.b16 %v441
        %v525 = vunpack.c.l.b16 %v442
        %v526 = vunpack.c.h.b16 %v442
        %v527 = vunpack.c.l.b16 %v443
        %v528 = vunpack.c.h.b16 %v443
        %v529 = vunpack.c.l.b16 %v444
        %v530 = vunpack.c.h.b16 %v444
        %v531 = vunpack.c.l.b16 %v445
        %v532 = vunpack.c.h.b16 %v445
        %v533 = vunpack.c.l.b16 %v446
        %v534 = vunpack.c.h.b16 %v446
        %v535 = vunpack.c.l.b16 %v447
        %v536 = vunpack.c.h.b16 %v447
        %v537 = vunpack.c.l.b16 %v448
        %v538 = vunpack.c.h.b16 %v448
        %v539 = vunpack.c.l.b16 %v449
        %v540 = vunpack.c.h.b16 %v449
        %v541 = vunpack.c.l.b16 %v450
        %v542 = vunpack.c.h.b16 %v450
        %v543 = vunpack.c.l.b16 %v451
        %v544 = vunpack.c.h.b16 %v451
        %v545 = vunpack.c.l.b16 %v452
        %v546 = vunpack.c.h.b16 %v452
        %v547 = vunpack.c.l.b16 %v453
        %v548 = vunpack.c.h.b16 %v453
        %v549 = vunpack.c.l.b16 %v454
        %v550 = vunpack.c.h.b16 %v454
        %v551 = vpack.c.b16 %v491, %v487
        %v552 = vpack.c.b16 %v492, %v488
        %v553 = vpack.c.b16 %v493, %v489
        %v554 = vpack.c.b16 %v494, %v490
        %v555 = vpack.c.b16 %v499, %v495
        %v556 = vpack.c.b16 %v500, %v496
        %v557 = vpack.c.b16 %v501, %v497
        %v558 = vpack.c.b16 %v502, %v498
        %v559 = vpack.c.b16 %v507, %v503
        %v560 = vpack.c.b16 %v508, %v504
        %v561 = vpack.c.b16 %v509, %v505
        %v562 = vpack.c.b16 %v510, %v506
        %v563 = vpack.c.b16 %v515, %v511
        %v564 = vpack.c.b16 %v516, %v512
        %v565 = vpack.c.b16 %v517, %v513
        %v566 = vpack.c.b16 %v518, %v514
        %v567 = vpack.c.b16 %v523, %v519
        %v568 = vpack.c.b16 %v524, %v520
        %v569 = vpack.c.b16 %v525, %v521
        %v570 = vpack.c.b16 %v526, %v522
        %v571 = vpack.c.b16 %v531, %v527
        %v572 = vpack.c.b16 %v532, %v528
        %v573 = vpack.c.b16 %v533, %v529
        %v574 = vpack.c.b16 %v534, %v530
        %v575 = vpack.c.b16 %v539, %v535
        %v576 = vpack.c.b16 %v540, %v536
        %v577 = vpack.c.b16 %v541, %v537
        %v578 = vpack.c.b16 %v542, %v538
        %v579 = vpack.c.b16 %v547, %v543
        %v580 = vpack.c.b16 %v548, %v544
        %v581 = vpack.c.b16 %v549, %v545
        %v582 = vpack.c.b16 %v550, %v546
        %615 = vmatprep.subr.bf16.mxu0 %v552
        %616 = vmatpush1.bf16.msra.mxu0 %v551
        %617 = vmatprep.subr.bf16.mxu0 %v556
        %618 = vmatpush1.bf16.msra.mxu0 %v555
        %619 = vmatprep.subr.bf16.mxu0 %v560
        %620 = vmatpush1.bf16.msra.mxu0 %v559
        %621 = vmatprep.subr.bf16.mxu0 %v564
        %622 = vmatpush1.bf16.msra.mxu0 %v563
        %623 = vmatprep.subr.bf16.mxu0 %v568
        %624 = vmatpush1.bf16.msra.mxu0 %v567
        %625 = vmatprep.subr.bf16.mxu0 %v572
        %626 = vmatpush1.bf16.msra.mxu0 %v571
        %627 = vmatprep.subr.bf16.mxu0 %v576
        %628 = vmatpush1.bf16.msra.mxu0 %v575
        %629 = vmatprep.subr.bf16.mxu0 %v580
        %630 = vmatpush1.bf16.msra.mxu0 %v579
        %631 = vmatprep.subr.bf16.mxu0 0
        %632 = vmatpush1.bf16.msra.mxu0 0
        %633 = vmatprep.subr.bf16.mxu0 0
        %634 = vmatpush1.bf16.msra.mxu0 0
        %635 = vmatprep.subr.bf16.mxu0 0
        %636 = vmatpush1.bf16.msra.mxu0 0
        %637 = vmatprep.subr.bf16.mxu0 0
        %638 = vmatpush1.bf16.msra.mxu0 0
        %639 = vmatprep.subr.bf16.mxu0 0
        %640 = vmatpush1.bf16.msra.mxu0 0
        %641 = vmatprep.subr.bf16.mxu0 0
        %642 = vmatpush1.bf16.msra.mxu0 0
        %643 = vmatprep.subr.bf16.mxu0 0
        %644 = vmatpush1.bf16.msra.mxu0 0
        %645 = vmatprep.subr.bf16.mxu0 0
        %646 = vmatpush1.bf16.msra.mxu0 0
        %647 = vmatprep.mubr.bf16.mxu0 0
        %648 = vmatmul.mubr.bf16.gmra.mrb[0].mxu0 %v422
        %v649 = vpop.f32.mrb[0].mxu0
        %v650 = vadd.f32 0.0, %v649
        %v651 = vpop.f32.mrb[0].mxu0
        %v652 = vadd.f32 0.0, %v651
        %v653 = vpop.f32.mrb[0].mxu0
        %v654 = vpop.f32.mrb[0].mxu0
        %655 = vdwg.mxu0
        %656 = vmatprep.subr.bf16.mxu0 %v554
        %657 = vmatpush1.bf16.msra.mxu0 %v553
        %658 = vmatprep.subr.bf16.mxu0 %v558
        %659 = vmatpush1.bf16.msra.mxu0 %v557
        %660 = vmatprep.subr.bf16.mxu0 %v562
        %661 = vmatpush1.bf16.msra.mxu0 %v561
        %662 = vmatprep.subr.bf16.mxu0 %v566
        %663 = vmatpush1.bf16.msra.mxu0 %v565
        %664 = vmatprep.subr.bf16.mxu0 %v570
        %665 = vmatpush1.bf16.msra.mxu0 %v569
        %666 = vmatprep.subr.bf16.mxu0 %v574
        %667 = vmatpush1.bf16.msra.mxu0 %v573
        %668 = vmatprep.subr.bf16.mxu0 %v578
        %669 = vmatpush1.bf16.msra.mxu0 %v577
        %670 = vmatprep.subr.bf16.mxu0 %v582
        %671 = vmatpush1.bf16.msra.mxu0 %v581
        %672 = vmatprep.subr.bf16.mxu0 0
        %673 = vmatpush1.bf16.msra.mxu0 0
        %674 = vmatprep.subr.bf16.mxu0 0
        %675 = vmatpush1.bf16.msra.mxu0 0
        %676 = vmatprep.subr.bf16.mxu0 0
        %677 = vmatpush1.bf16.msra.mxu0 0
        %678 = vmatprep.subr.bf16.mxu0 0
        %679 = vmatpush1.bf16.msra.mxu0 0
        %680 = vmatprep.subr.bf16.mxu0 0
        %681 = vmatpush1.bf16.msra.mxu0 0
        %682 = vmatprep.subr.bf16.mxu0 0
        %683 = vmatpush1.bf16.msra.mxu0 0
        %684 = vmatprep.subr.bf16.mxu0 0
        %685 = vmatpush1.bf16.msra.mxu0 0
        %686 = vmatprep.subr.bf16.mxu0 0
        %687 = vmatpush1.bf16.msra.mxu0 0
        %688 = vmatprep.mubr.bf16.mxu0 0
        %689 = vmatmul.mubr.bf16.gmra.mrb[0].mxu0 %v422
        %v690 = vpop.f32.mrb[0].mxu0
        %v691 = vadd.f32 0.0, %v690
        %v692 = vpop.f32.mrb[0].mxu0
        %v693 = vadd.f32 0.0, %v692
        %v694 = vpop.f32.mrb[0].mxu0
        %v695 = vpop.f32.mrb[0].mxu0
        %696 = vdwg.mxu0
        %v729 = vunpack.c.l.b16 %v390
        %v730 = vunpack.c.h.b16 %v390
        %v731 = vunpack.c.l.b16 %v391
        %v732 = vunpack.c.h.b16 %v391
        %v733 = vunpack.c.l.b16 %v392
        %v734 = vunpack.c.h.b16 %v392
        %v735 = vunpack.c.l.b16 %v393
        %v736 = vunpack.c.h.b16 %v393
        %v737 = vunpack.c.l.b16 %v394
        %v738 = vunpack.c.h.b16 %v394
        %v739 = vunpack.c.l.b16 %v395
        %v740 = vunpack.c.h.b16 %v395
        %v741 = vunpack.c.l.b16 %v396
        %v742 = vunpack.c.h.b16 %v396
        %v743 = vunpack.c.l.b16 %v397
        %v744 = vunpack.c.h.b16 %v397
        %v745 = vunpack.c.l.b16 %v398
        %v746 = vunpack.c.h.b16 %v398
        %v747 = vunpack.c.l.b16 %v399
        %v748 = vunpack.c.h.b16 %v399
        %v749 = vunpack.c.l.b16 %v400
        %v750 = vunpack.c.h.b16 %v400
        %v751 = vunpack.c.l.b16 %v401
        %v752 = vunpack.c.h.b16 %v401
        %v753 = vunpack.c.l.b16 %v402
        %v754 = vunpack.c.h.b16 %v402
        %v755 = vunpack.c.l.b16 %v403
        %v756 = vunpack.c.h.b16 %v403
        %v757 = vunpack.c.l.b16 %v404
        %v758 = vunpack.c.h.b16 %v404
        %v759 = vunpack.c.l.b16 %v405
        %v760 = vunpack.c.h.b16 %v405
        %v761 = vunpack.c.l.b16 %v406
        %v762 = vunpack.c.h.b16 %v406
        %v763 = vunpack.c.l.b16 %v407
        %v764 = vunpack.c.h.b16 %v407
        %v765 = vunpack.c.l.b16 %v408
        %v766 = vunpack.c.h.b16 %v408
        %v767 = vunpack.c.l.b16 %v409
        %v768 = vunpack.c.h.b16 %v409
        %v769 = vunpack.c.l.b16 %v410
        %v770 = vunpack.c.h.b16 %v410
        %v771 = vunpack.c.l.b16 %v411
        %v772 = vunpack.c.h.b16 %v411
        %v773 = vunpack.c.l.b16 %v412
        %v774 = vunpack.c.h.b16 %v412
        %v775 = vunpack.c.l.b16 %v413
        %v776 = vunpack.c.h.b16 %v413
        %v777 = vunpack.c.l.b16 %v414
        %v778 = vunpack.c.h.b16 %v414
        %v779 = vunpack.c.l.b16 %v415
        %v780 = vunpack.c.h.b16 %v415
        %v781 = vunpack.c.l.b16 %v416
        %v782 = vunpack.c.h.b16 %v416
        %v783 = vunpack.c.l.b16 %v417
        %v784 = vunpack.c.h.b16 %v417
        %v785 = vunpack.c.l.b16 %v418
        %v786 = vunpack.c.h.b16 %v418
        %v787 = vunpack.c.l.b16 %v419
        %v788 = vunpack.c.h.b16 %v419
        %v789 = vunpack.c.l.b16 %v420
        %v790 = vunpack.c.h.b16 %v420
        %v791 = vunpack.c.l.b16 %v421
        %v792 = vunpack.c.h.b16 %v421
        %v793 = vpack.c.b16 %v733, %v729
        %v794 = vpack.c.b16 %v734, %v730
        %v795 = vpack.c.b16 %v735, %v731
        %v796 = vpack.c.b16 %v736, %v732
        %v797 = vpack.c.b16 %v741, %v737
        %v798 = vpack.c.b16 %v742, %v738
        %v799 = vpack.c.b16 %v743, %v739
        %v800 = vpack.c.b16 %v744, %v740
        %v801 = vpack.c.b16 %v749, %v745
        %v802 = vpack.c.b16 %v750, %v746
        %v803 = vpack.c.b16 %v751, %v747
        %v804 = vpack.c.b16 %v752, %v748
        %v805 = vpack.c.b16 %v757, %v753
        %v806 = vpack.c.b16 %v758, %v754
        %v807 = vpack.c.b16 %v759, %v755
        %v808 = vpack.c.b16 %v760, %v756
        %v809 = vpack.c.b16 %v765, %v761
        %v810 = vpack.c.b16 %v766, %v762
        %v811 = vpack.c.b16 %v767, %v763
        %v812 = vpack.c.b16 %v768, %v764
        %v813 = vpack.c.b16 %v773, %v769
        %v814 = vpack.c.b16 %v774, %v770
        %v815 = vpack.c.b16 %v775, %v771
        %v816 = vpack.c.b16 %v776, %v772
        %v817 = vpack.c.b16 %v781, %v777
        %v818 = vpack.c.b16 %v782, %v778
        %v819 = vpack.c.b16 %v783, %v779
        %v820 = vpack.c.b16 %v784, %v780
        %v821 = vpack.c.b16 %v789, %v785
        %v822 = vpack.c.b16 %v790, %v786
        %v823 = vpack.c.b16 %v791, %v787
        %v824 = vpack.c.b16 %v792, %v788
        %857 = vmatprep.subr.bf16.mxu0 %v794
        %858 = vmatpush1.bf16.msra.mxu0 %v793
        %859 = vmatprep.subr.bf16.mxu0 %v798
        %860 = vmatpush1.bf16.msra.mxu0 %v797
        %861 = vmatprep.subr.bf16.mxu0 %v802
        %862 = vmatpush1.bf16.msra.mxu0 %v801
        %863 = vmatprep.subr.bf16.mxu0 %v806
        %864 = vmatpush1.bf16.msra.mxu0 %v805
        %865 = vmatprep.subr.bf16.mxu0 %v810
        %866 = vmatpush1.bf16.msra.mxu0 %v809
        %867 = vmatprep.subr.bf16.mxu0 %v814
        %868 = vmatpush1.bf16.msra.mxu0 %v813
        %869 = vmatprep.subr.bf16.mxu0 %v818
        %870 = vmatpush1.bf16.msra.mxu0 %v817
        %871 = vmatprep.subr.bf16.mxu0 %v822
        %872 = vmatpush1.bf16.msra.mxu0 %v821
        %873 = vmatprep.subr.bf16.mxu0 0
        %874 = vmatpush1.bf16.msra.mxu0 0
        %875 = vmatprep.subr.bf16.mxu0 0
        %876 = vmatpush1.bf16.msra.mxu0 0
        %877 = vmatprep.subr.bf16.mxu0 0
        %878 = vmatpush1.bf16.msra.mxu0 0
        %879 = vmatprep.subr.bf16.mxu0 0
        %880 = vmatpush1.bf16.msra.mxu0 0
        %881 = vmatprep.subr.bf16.mxu0 0
        %882 = vmatpush1.bf16.msra.mxu0 0
        %883 = vmatprep.subr.bf16.mxu0 0
        %884 = vmatpush1.bf16.msra.mxu0 0
        %885 = vmatprep.subr.bf16.mxu0 0
        %886 = vmatpush1.bf16.msra.mxu0 0
        %887 = vmatprep.subr.bf16.mxu0 0
        %888 = vmatpush1.bf16.msra.mxu0 0
        %889 = vmatprep.mubr.bf16.mxu0 0
        %890 = vmatmul.mubr.bf16.gmra.mrb[0].mxu0 %v389
        %v891 = vpop.f32.mrb[0].mxu0
        %v892 = vadd.f32 %v650, %v891
        %v893 = vpop.f32.mrb[0].mxu0
        %v894 = vadd.f32 %v652, %v893
        %v895 = vpop.f32.mrb[0].mxu0
        %v896 = vpop.f32.mrb[0].mxu0
        %897 = vdwg.mxu0
        %898 = vmatprep.subr.bf16.mxu0 %v796
        %899 = vmatpush1.bf16.msra.mxu0 %v795
        %900 = vmatprep.subr.bf16.mxu0 %v800
        %901 = vmatpush1.bf16.msra.mxu0 %v799
        %902 = vmatprep.subr.bf16.mxu0 %v804
        %903 = vmatpush1.bf16.msra.mxu0 %v803
        %904 = vmatprep.subr.bf16.mxu0 %v808
        %905 = vmatpush1.bf16.msra.mxu0 %v807
        %906 = vmatprep.subr.bf16.mxu0 %v812
        %907 = vmatpush1.bf16.msra.mxu0 %v811
        %908 = vmatprep.subr.bf16.mxu0 %v816
        %909 = vmatpush1.bf16.msra.mxu0 %v815
        %910 = vmatprep.subr.bf16.mxu0 %v820
        %911 = vmatpush1.bf16.msra.mxu0 %v819
        %912 = vmatprep.subr.bf16.mxu0 %v824
        %913 = vmatpush1.bf16.msra.mxu0 %v823
        %914 = vmatprep.subr.bf16.mxu0 0
        %915 = vmatpush1.bf16.msra.mxu0 0
        %916 = vmatprep.subr.bf16.mxu0 0
        %917 = vmatpush1.bf16.msra.mxu0 0
        %918 = vmatprep.subr.bf16.mxu0 0
        %919 = vmatpush1.bf16.msra.mxu0 0
        %920 = vmatprep.subr.bf16.mxu0 0
        %921 = vmatpush1.bf16.msra.mxu0 0
        %922 = vmatprep.subr.bf16.mxu0 0
        %923 = vmatpush1.bf16.msra.mxu0 0
        %924 = vmatprep.subr.bf16.mxu0 0
        %925 = vmatpush1.bf16.msra.mxu0 0
        %926 = vmatprep.subr.bf16.mxu0 0
        %927 = vmatpush1.bf16.msra.mxu0 0
        %928 = vmatprep.subr.bf16.mxu0 0
        %929 = vmatpush1.bf16.msra.mxu0 0
        %930 = vmatprep.mubr.bf16.mxu0 0
        %931 = vmatmul.mubr.bf16.gmra.mrb[0].mxu0 %v389
        %v932 = vpop.f32.mrb[0].mxu0
        %v933 = vadd.f32 %v691, %v932
        %v934 = vpop.f32.mrb[0].mxu0
        %v935 = vadd.f32 %v693, %v934
        %v936 = vpop.f32.mrb[0].mxu0
        %v937 = vpop.f32.mrb[0].mxu0
        %938 = vdwg.mxu0
        %v939 = vld [vmem:[%s5] sm:$0xf]
        %v941 = vlaneseq
        %v942 = vshrl.u32 %v941, 7
        %v943 = vsub.s32 0, %v942
        %v944 = vrot.slane %v939, %v943
        %v945 = vlaneseq
        %v946 = vshrl.u32 %v945, 7
        %v947 = vsub.s32 1, %v946
        %v948 = vrot.slane %v939, %v947
        %v949 = vlaneseq
        %v950 = vshrl.u32 %v949, 7
        %v951 = vsub.s32 2, %v950
        %v952 = vrot.slane %v939, %v951
        %v953 = vlaneseq
        %v954 = vshrl.u32 %v953, 7
        %v955 = vsub.s32 3, %v954
        %v956 = vrot.slane %v939, %v955
        %v961 = vadd.f32 %v892, %v944
        %v962 = vadd.f32 %v894, %v948
        %v963 = vadd.f32 %v933, %v952
        %v964 = vadd.f32 %v935, %v956
        %v965 = vxor.u32 %v961, 2147483648
        %v966 = vxor.u32 %v962, 2147483648
        %v967 = vxor.u32 %v963, 2147483648
        %v968 = vmul.f32 %v965, 1.442695
        %v969 = vpow.pop %v968
        %v970 = vmul.f32 %v966, 1.442695
        %v971 = vpow.pop %v970
        %v972 = vmul.f32 %v967, 1.442695
        %v973 = vpow.pop %v972
        %v974 = vadd.f32 %v969, 1.0
        %v975 = vadd.f32 %v971, 1.0
        %v976 = vadd.f32 %v973, 1.0
        %v977 = vrcp.pop %v974
        %v978 = vmul.f32 1.0, %v977
        %v979 = vrcp.pop %v975
        %v980 = vmul.f32 1.0, %v979
        %v981 = vrcp.pop %v976
        %v982 = vmul.f32 1.0, %v981
        %v983 = vtanh.pop %v964
        %v984 = vmul.f32 %v388, %v980
        %v985 = vmul.f32 %v978, %v983
        %v986 = vadd.f32 %v984, %v985
        %v987 = vtanh.pop %v986
        %v988 = vmul.f32 %v982, %v987
        %s989 = scalar_lea.vmem %s335, 4 [#allocation4]
        %v990 = vld [vmem:[%s989] sm:$0xf]
        %v991 = vpack.c.bf16 %v988, %v988
        %992 = vmatprep.subr.bf16.mxu0 %v552
        %993 = vmatpush1.bf16.msra.mxu0 %v551
        %994 = vmatprep.subr.bf16.mxu0 %v556
        %995 = vmatpush1.bf16.msra.mxu0 %v555
        %996 = vmatprep.subr.bf16.mxu0 %v560
        %997 = vmatpush1.bf16.msra.mxu0 %v559
        %998 = vmatprep.subr.bf16.mxu0 %v564
        %999 = vmatpush1.bf16.msra.mxu0 %v563
        %1000 = vmatprep.subr.bf16.mxu0 %v568
        %1001 = vmatpush1.bf16.msra.mxu0 %v567
        %1002 = vmatprep.subr.bf16.mxu0 %v572
        %1003 = vmatpush1.bf16.msra.mxu0 %v571
        %1004 = vmatprep.subr.bf16.mxu0 %v576
        %1005 = vmatpush1.bf16.msra.mxu0 %v575
        %1006 = vmatprep.subr.bf16.mxu0 %v580
        %1007 = vmatpush1.bf16.msra.mxu0 %v579
        %1008 = vmatprep.subr.bf16.mxu0 0
        %1009 = vmatpush1.bf16.msra.mxu0 0
        %1010 = vmatprep.subr.bf16.mxu0 0
        %1011 = vmatpush1.bf16.msra.mxu0 0
        %1012 = vmatprep.subr.bf16.mxu0 0
        %1013 = vmatpush1.bf16.msra.mxu0 0
        %1014 = vmatprep.subr.bf16.mxu0 0
        %1015 = vmatpush1.bf16.msra.mxu0 0
        %1016 = vmatprep.subr.bf16.mxu0 0
        %1017 = vmatpush1.bf16.msra.mxu0 0
        %1018 = vmatprep.subr.bf16.mxu0 0
        %1019 = vmatpush1.bf16.msra.mxu0 0
        %1020 = vmatprep.subr.bf16.mxu0 0
        %1021 = vmatpush1.bf16.msra.mxu0 0
        %1022 = vmatprep.subr.bf16.mxu0 0
        %1023 = vmatpush1.bf16.msra.mxu0 0
        %1024 = vmatprep.mubr.bf16.mxu0 0
        %1025 = vmatmul.mubr.bf16.gmra.mrb[0].mxu0 %v991
        %v1026 = vpop.f32.mrb[0].mxu0
        %v1027 = vadd.f32 0.0, %v1026
        %v1028 = vpop.f32.mrb[0].mxu0
        %v1029 = vadd.f32 0.0, %v1028
        %v1030 = vpop.f32.mrb[0].mxu0
        %v1031 = vpop.f32.mrb[0].mxu0
        %1032 = vdwg.mxu0
        %1033 = vmatprep.subr.bf16.mxu0 %v554
        %1034 = vmatpush1.bf16.msra.mxu0 %v553
        %1035 = vmatprep.subr.bf16.mxu0 %v558
        %1036 = vmatpush1.bf16.msra.mxu0 %v557
        %1037 = vmatprep.subr.bf16.mxu0 %v562
        %1038 = vmatpush1.bf16.msra.mxu0 %v561
        %1039 = vmatprep.subr.bf16.mxu0 %v566
        %1040 = vmatpush1.bf16.msra.mxu0 %v565
        %1041 = vmatprep.subr.bf16.mxu0 %v570
        %1042 = vmatpush1.bf16.msra.mxu0 %v569
        %1043 = vmatprep.subr.bf16.mxu0 %v574
        %1044 = vmatpush1.bf16.msra.mxu0 %v573
        %1045 = vmatprep.subr.bf16.mxu0 %v578
        %1046 = vmatpush1.bf16.msra.mxu0 %v577
        %1047 = vmatprep.subr.bf16.mxu0 %v582
        %1048 = vmatpush1.bf16.msra.mxu0 %v581
        %1049 = vmatprep.subr.bf16.mxu0 0
        %1050 = vmatpush1.bf16.msra.mxu0 0
        %1051 = vmatprep.subr.bf16.mxu0 0
        %1052 = vmatpush1.bf16.msra.mxu0 0
        %1053 = vmatprep.subr.bf16.mxu0 0
        %1054 = vmatpush1.bf16.msra.mxu0 0
        %1055 = vmatprep.subr.bf16.mxu0 0
        %1056 = vmatpush1.bf16.msra.mxu0 0
        %1057 = vmatprep.subr.bf16.mxu0 0
        %1058 = vmatpush1.bf16.msra.mxu0 0
        %1059 = vmatprep.subr.bf16.mxu0 0
        %1060 = vmatpush1.bf16.msra.mxu0 0
        %1061 = vmatprep.subr.bf16.mxu0 0
        %1062 = vmatpush1.bf16.msra.mxu0 0
        %1063 = vmatprep.subr.bf16.mxu0 0
        %1064 = vmatpush1.bf16.msra.mxu0 0
        %1065 = vmatprep.mubr.bf16.mxu0 0
        %1066 = vmatmul.mubr.bf16.gmra.mrb[0].mxu0 %v991
        %v1067 = vpop.f32.mrb[0].mxu0
        %v1068 = vadd.f32 0.0, %v1067
        %v1069 = vpop.f32.mrb[0].mxu0
        %v1070 = vadd.f32 0.0, %v1069
        %v1071 = vpop.f32.mrb[0].mxu0
        %v1072 = vpop.f32.mrb[0].mxu0
        %1073 = vdwg.mxu0
        %1074 = vmatprep.subr.bf16.mxu0 %v794
        %1075 = vmatpush1.bf16.msra.mxu0 %v793
        %1076 = vmatprep.subr.bf16.mxu0 %v798
        %1077 = vmatpush1.bf16.msra.mxu0 %v797
        %1078 = vmatprep.subr.bf16.mxu0 %v802
        %1079 = vmatpush1.bf16.msra.mxu0 %v801
        %1080 = vmatprep.subr.bf16.mxu0 %v806
        %1081 = vmatpush1.bf16.msra.mxu0 %v805
        %1082 = vmatprep.subr.bf16.mxu0 %v810
        %1083 = vmatpush1.bf16.msra.mxu0 %v809
        %1084 = vmatprep.subr.bf16.mxu0 %v814
        %1085 = vmatpush1.bf16.msra.mxu0 %v813
        %1086 = vmatprep.subr.bf16.mxu0 %v818
        %1087 = vmatpush1.bf16.msra.mxu0 %v817
        %1088 = vmatprep.subr.bf16.mxu0 %v822
        %1089 = vmatpush1.bf16.msra.mxu0 %v821
        %1090 = vmatprep.subr.bf16.mxu0 0
        %1091 = vmatpush1.bf16.msra.mxu0 0
        %1092 = vmatprep.subr.bf16.mxu0 0
        %1093 = vmatpush1.bf16.msra.mxu0 0
        %1094 = vmatprep.subr.bf16.mxu0 0
        %1095 = vmatpush1.bf16.msra.mxu0 0
        %1096 = vmatprep.subr.bf16.mxu0 0
        %1097 = vmatpush1.bf16.msra.mxu0 0
        %1098 = vmatprep.subr.bf16.mxu0 0
        %1099 = vmatpush1.bf16.msra.mxu0 0
        %1100 = vmatprep.subr.bf16.mxu0 0
        %1101 = vmatpush1.bf16.msra.mxu0 0
        %1102 = vmatprep.subr.bf16.mxu0 0
        %1103 = vmatpush1.bf16.msra.mxu0 0
        %1104 = vmatprep.subr.bf16.mxu0 0
        %1105 = vmatpush1.bf16.msra.mxu0 0
        %1106 = vmatprep.mubr.bf16.mxu0 0
        %1107 = vmatmul.mubr.bf16.gmra.mrb[0].mxu0 %v990
        %v1108 = vpop.f32.mrb[0].mxu0
        %v1109 = vadd.f32 %v1027, %v1108
        %v1110 = vpop.f32.mrb[0].mxu0
        %v1111 = vadd.f32 %v1029, %v1110
        %v1112 = vpop.f32.mrb[0].mxu0
        %v1113 = vpop.f32.mrb[0].mxu0
        %1114 = vdwg.mxu0
        %1115 = vmatprep.subr.bf16.mxu0 %v796
        %1116 = vmatpush1.bf16.msra.mxu0 %v795
        %1117 = vmatprep.subr.bf16.mxu0 %v800
        %1118 = vmatpush1.bf16.msra.mxu0 %v799
        %1119 = vmatprep.subr.bf16.mxu0 %v804
        %1120 = vmatpush1.bf16.msra.mxu0 %v803
        %1121 = vmatprep.subr.bf16.mxu0 %v808
        %1122 = vmatpush1.bf16.msra.mxu0 %v807
        %1123 = vmatprep.subr.bf16.mxu0 %v812
        %1124 = vmatpush1.bf16.msra.mxu0 %v811
        %1125 = vmatprep.subr.bf16.mxu0 %v816
        %1126 = vmatpush1.bf16.msra.mxu0 %v815
        %1127 = vmatprep.subr.bf16.mxu0 %v820
        %1128 = vmatpush1.bf16.msra.mxu0 %v819
        %1129 = vmatprep.subr.bf16.mxu0 %v824
        %1130 = vmatpush1.bf16.msra.mxu0 %v823
        %1131 = vmatprep.subr.bf16.mxu0 0
        %1132 = vmatpush1.bf16.msra.mxu0 0
        %1133 = vmatprep.subr.bf16.mxu0 0
        %1134 = vmatpush1.bf16.msra.mxu0 0
        %1135 = vmatprep.subr.bf16.mxu0 0
        %1136 = vmatpush1.bf16.msra.mxu0 0
        %1137 = vmatprep.subr.bf16.mxu0 0
        %1138 = vmatpush1.bf16.msra.mxu0 0
        %1139 = vmatprep.subr.bf16.mxu0 0
        %1140 = vmatpush1.bf16.msra.mxu0 0
        %1141 = vmatprep.subr.bf16.mxu0 0
        %1142 = vmatpush1.bf16.msra.mxu0 0
        %1143 = vmatprep.subr.bf16.mxu0 0
        %1144 = vmatpush1.bf16.msra.mxu0 0
        %1145 = vmatprep.subr.bf16.mxu0 0
        %1146 = vmatpush1.bf16.msra.mxu0 0
        %1147 = vmatprep.mubr.bf16.mxu0 0
        %1148 = vmatmul.mubr.bf16.gmra.mrb[0].mxu0 %v990
        %v1149 = vpop.f32.mrb[0].mxu0
        %v1150 = vadd.f32 %v1068, %v1149
        %v1151 = vpop.f32.mrb[0].mxu0
        %v1152 = vadd.f32 %v1070, %v1151
        %v1153 = vpop.f32.mrb[0].mxu0
        %v1154 = vpop.f32.mrb[0].mxu0
        %1155 = vdwg.mxu0
        %v1156 = vadd.f32 %v1109, %v944
        %v1157 = vadd.f32 %v1111, %v948
        %v1158 = vadd.f32 %v1150, %v952
        %v1159 = vadd.f32 %v1152, %v956
        %v1160 = vxor.u32 %v1156, 2147483648
        %v1161 = vxor.u32 %v1157, 2147483648
        %v1162 = vxor.u32 %v1158, 2147483648
        %v1163 = vmul.f32 %v1160, 1.442695
        %v1164 = vpow.pop %v1163
        %v1165 = vmul.f32 %v1161, 1.442695
        %v1166 = vpow.pop %v1165
        %v1167 = vmul.f32 %v1162, 1.442695
        %v1168 = vpow.pop %v1167
        %v1169 = vadd.f32 %v1164, 1.0
        %v1170 = vadd.f32 %v1166, 1.0
        %v1171 = vadd.f32 %v1168, 1.0
        %v1172 = vrcp.pop %v1169
        %v1173 = vmul.f32 1.0, %v1172
        %v1174 = vrcp.pop %v1170
        %v1175 = vmul.f32 1.0, %v1174
        %v1176 = vrcp.pop %v1171
        %v1177 = vmul.f32 1.0, %v1176
        %v1178 = vtanh.pop %v1159
        %v1179 = vmul.f32 %v986, %v1175
        %v1180 = vmul.f32 %v1173, %v1178
        %v1181 = vadd.f32 %v1179, %v1180
        %v1182 = vtanh.pop %v1181
        %v1183 = vmul.f32 %v1177, %v1182
        %s1184 = scalar_lea.vmem %s335, 8 [#allocation4]
        %v1185 = vld [vmem:[%s1184] sm:$0xf]
        %v1186 = vpack.c.bf16 %v1183, %v1183
        %1187 = vmatprep.subr.bf16.mxu0 %v552
        %1188 = vmatpush1.bf16.msra.mxu0 %v551
        %1189 = vmatprep.subr.bf16.mxu0 %v556
        %1190 = vmatpush1.bf16.msra.mxu0 %v555
        %1191 = vmatprep.subr.bf16.mxu0 %v560
        %1192 = vmatpush1.bf16.msra.mxu0 %v559
        %1193 = vmatprep.subr.bf16.mxu0 %v564
        %1194 = vmatpush1.bf16.msra.mxu0 %v563
        %1195 = vmatprep.subr.bf16.mxu0 %v568
        %1196 = vmatpush1.bf16.msra.mxu0 %v567
        %1197 = vmatprep.subr.bf16.mxu0 %v572
        %1198 = vmatpush1.bf16.msra.mxu0 %v571
        %1199 = vmatprep.subr.bf16.mxu0 %v576
        %1200 = vmatpush1.bf16.msra.mxu0 %v575
        %1201 = vmatprep.subr.bf16.mxu0 %v580
        %1202 = vmatpush1.bf16.msra.mxu0 %v579
        %1203 = vmatprep.subr.bf16.mxu0 0
        %1204 = vmatpush1.bf16.msra.mxu0 0
        %1205 = vmatprep.subr.bf16.mxu0 0
        %1206 = vmatpush1.bf16.msra.mxu0 0
        %1207 = vmatprep.subr.bf16.mxu0 0
        %1208 = vmatpush1.bf16.msra.mxu0 0
        %1209 = vmatprep.subr.bf16.mxu0 0
        %1210 = vmatpush1.bf16.msra.mxu0 0
        %1211 = vmatprep.subr.bf16.mxu0 0
        %1212 = vmatpush1.bf16.msra.mxu0 0
        %1213 = vmatprep.subr.bf16.mxu0 0
        %1214 = vmatpush1.bf16.msra.mxu0 0
        %1215 = vmatprep.subr.bf16.mxu0 0
        %1216 = vmatpush1.bf16.msra.mxu0 0
        %1217 = vmatprep.subr.bf16.mxu0 0
        %1218 = vmatpush1.bf16.msra.mxu0 0
        %1219 = vmatprep.mubr.bf16.mxu0 0
        %1220 = vmatmul.mubr.bf16.gmra.mrb[0].mxu0 %v1186
        %v1221 = vpop.f32.mrb[0].mxu0
        %v1222 = vadd.f32 0.0, %v1221
        %v1223 = vpop.f32.mrb[0].mxu0
        %v1224 = vadd.f32 0.0, %v1223
        %v1225 = vpop.f32.mrb[0].mxu0
        %v1226 = vpop.f32.mrb[0].mxu0
        %1227 = vdwg.mxu0
        %1228 = vmatprep.subr.bf16.mxu0 %v554
        %1229 = vmatpush1.bf16.msra.mxu0 %v553
        %1230 = vmatprep.subr.bf16.mxu0 %v558
        %1231 = vmatpush1.bf16.msra.mxu0 %v557
        %1232 = vmatprep.subr.bf16.mxu0 %v562
        %1233 = vmatpush1.bf16.msra.mxu0 %v561
        %1234 = vmatprep.subr.bf16.mxu0 %v566
        %1235 = vmatpush1.bf16.msra.mxu0 %v565
        %1236 = vmatprep.subr.bf16.mxu0 %v570
        %1237 = vmatpush1.bf16.msra.mxu0 %v569
        %1238 = vmatprep.subr.bf16.mxu0 %v574
        %1239 = vmatpush1.bf16.msra.mxu0 %v573
        %1240 = vmatprep.subr.bf16.mxu0 %v578
        %1241 = vmatpush1.bf16.msra.mxu0 %v577
        %1242 = vmatprep.subr.bf16.mxu0 %v582
        %1243 = vmatpush1.bf16.msra.mxu0 %v581
        %1244 = vmatprep.subr.bf16.mxu0 0
        %1245 = vmatpush1.bf16.msra.mxu0 0
        %1246 = vmatprep.subr.bf16.mxu0 0
        %1247 = vmatpush1.bf16.msra.mxu0 0
        %1248 = vmatprep.subr.bf16.mxu0 0
        %1249 = vmatpush1.bf16.msra.mxu0 0
        %1250 = vmatprep.subr.bf16.mxu0 0
        %1251 = vmatpush1.bf16.msra.mxu0 0
        %1252 = vmatprep.subr.bf16.mxu0 0
        %1253 = vmatpush1.bf16.msra.mxu0 0
        %1254 = vmatprep.subr.bf16.mxu0 0
        %1255 = vmatpush1.bf16.msra.mxu0 0
        %1256 = vmatprep.subr.bf16.mxu0 0
        %1257 = vmatpush1.bf16.msra.mxu0 0
        %1258 = vmatprep.subr.bf16.mxu0 0
        %1259 = vmatpush1.bf16.msra.mxu0 0
        %1260 = vmatprep.mubr.bf16.mxu0 0
        %1261 = vmatmul.mubr.bf16.gmra.mrb[0].mxu0 %v1186
        %v1262 = vpop.f32.mrb[0].mxu0
        %v1263 = vadd.f32 0.0, %v1262
        %v1264 = vpop.f32.mrb[0].mxu0
        %v1265 = vadd.f32 0.0, %v1264
        %v1266 = vpop.f32.mrb[0].mxu0
        %v1267 = vpop.f32.mrb[0].mxu0
        %1268 = vdwg.mxu0
        %1269 = vmatprep.subr.bf16.mxu0 %v794
        %1270 = vmatpush1.bf16.msra.mxu0 %v793
        %1271 = vmatprep.subr.bf16.mxu0 %v798
        %1272 = vmatpush1.bf16.msra.mxu0 %v797
        %1273 = vmatprep.subr.bf16.mxu0 %v802
        %1274 = vmatpush1.bf16.msra.mxu0 %v801
        %1275 = vmatprep.subr.bf16.mxu0 %v806
        %1276 = vmatpush1.bf16.msra.mxu0 %v805
        %1277 = vmatprep.subr.bf16.mxu0 %v810
        %1278 = vmatpush1.bf16.msra.mxu0 %v809
        %1279 = vmatprep.subr.bf16.mxu0 %v814
        %1280 = vmatpush1.bf16.msra.mxu0 %v813
        %1281 = vmatprep.subr.bf16.mxu0 %v818
        %1282 = vmatpush1.bf16.msra.mxu0 %v817
        %1283 = vmatprep.subr.bf16.mxu0 %v822
        %1284 = vmatpush1.bf16.msra.mxu0 %v821
        %1285 = vmatprep.subr.bf16.mxu0 0
        %1286 = vmatpush1.bf16.msra.mxu0 0
        %1287 = vmatprep.subr.bf16.mxu0 0
        %1288 = vmatpush1.bf16.msra.mxu0 0
        %1289 = vmatprep.subr.bf16.mxu0 0
        %1290 = vmatpush1.bf16.msra.mxu0 0
        %1291 = vmatprep.subr.bf16.mxu0 0
        %1292 = vmatpush1.bf16.msra.mxu0 0
        %1293 = vmatprep.subr.bf16.mxu0 0
        %1294 = vmatpush1.bf16.msra.mxu0 0
        %1295 = vmatprep.subr.bf16.mxu0 0
        %1296 = vmatpush1.bf16.msra.mxu0 0
        %1297 = vmatprep.subr.bf16.mxu0 0
        %1298 = vmatpush1.bf16.msra.mxu0 0
        %1299 = vmatprep.subr.bf16.mxu0 0
        %1300 = vmatpush1.bf16.msra.mxu0 0
        %1301 = vmatprep.mubr.bf16.mxu0 0
        %1302 = vmatmul.mubr.bf16.gmra.mrb[0].mxu0 %v1185
        %v1303 = vpop.f32.mrb[0].mxu0
        %v1304 = vadd.f32 %v1222, %v1303
        %v1305 = vpop.f32.mrb[0].mxu0
        %v1306 = vadd.f32 %v1224, %v1305
        %v1307 = vpop.f32.mrb[0].mxu0
        %v1308 = vpop.f32.mrb[0].mxu0
        %1309 = vdwg.mxu0
        %1310 = vmatprep.subr.bf16.mxu0 %v796
        %1311 = vmatpush1.bf16.msra.mxu0 %v795
        %1312 = vmatprep.subr.bf16.mxu0 %v800
        %1313 = vmatpush1.bf16.msra.mxu0 %v799
        %1314 = vmatprep.subr.bf16.mxu0 %v804
        %1315 = vmatpush1.bf16.msra.mxu0 %v803
        %1316 = vmatprep.subr.bf16.mxu0 %v808
        %1317 = vmatpush1.bf16.msra.mxu0 %v807
        %1318 = vmatprep.subr.bf16.mxu0 %v812
        %1319 = vmatpush1.bf16.msra.mxu0 %v811
        %1320 = vmatprep.subr.bf16.mxu0 %v816
        %1321 = vmatpush1.bf16.msra.mxu0 %v815
        %1322 = vmatprep.subr.bf16.mxu0 %v820
        %1323 = vmatpush1.bf16.msra.mxu0 %v819
        %1324 = vmatprep.subr.bf16.mxu0 %v824
        %1325 = vmatpush1.bf16.msra.mxu0 %v823
        %1326 = vmatprep.subr.bf16.mxu0 0
        %1327 = vmatpush1.bf16.msra.mxu0 0
        %1328 = vmatprep.subr.bf16.mxu0 0
        %1329 = vmatpush1.bf16.msra.mxu0 0
        %1330 = vmatprep.subr.bf16.mxu0 0
        %1331 = vmatpush1.bf16.msra.mxu0 0
        %1332 = vmatprep.subr.bf16.mxu0 0
        %1333 = vmatpush1.bf16.msra.mxu0 0
        %1334 = vmatprep.subr.bf16.mxu0 0
        %1335 = vmatpush1.bf16.msra.mxu0 0
        %1336 = vmatprep.subr.bf16.mxu0 0
        %1337 = vmatpush1.bf16.msra.mxu0 0
        %1338 = vmatprep.subr.bf16.mxu0 0
        %1339 = vmatpush1.bf16.msra.mxu0 0
        %1340 = vmatprep.subr.bf16.mxu0 0
        %1341 = vmatpush1.bf16.msra.mxu0 0
        %1342 = vmatprep.mubr.bf16.mxu0 0
        %1343 = vmatmul.mubr.bf16.gmra.mrb[0].mxu0 %v1185
        %v1344 = vpop.f32.mrb[0].mxu0
        %v1345 = vadd.f32 %v1263, %v1344
        %v1346 = vpop.f32.mrb[0].mxu0
        %v1347 = vadd.f32 %v1265, %v1346
        %v1348 = vpop.f32.mrb[0].mxu0
        %v1349 = vpop.f32.mrb[0].mxu0
        %1350 = vdwg.mxu0
        %v1351 = vadd.f32 %v1304, %v944
        %v1352 = vadd.f32 %v1306, %v948
        %v1353 = vadd.f32 %v1345, %v952
        %v1354 = vadd.f32 %v1347, %v956
        %v1355 = vxor.u32 %v1351, 2147483648
        %v1356 = vxor.u32 %v1352, 2147483648
        %v1357 = vxor.u32 %v1353, 2147483648
        %v1358 = vmul.f32 %v1355, 1.442695
        %v1359 = vpow.pop %v1358
        %v1360 = vmul.f32 %v1356, 1.442695
        %v1361 = vpow.pop %v1360
        %v1362 = vmul.f32 %v1357, 1.442695
        %v1363 = vpow.pop %v1362
        %v1364 = vadd.f32 %v1359, 1.0
        %v1365 = vadd.f32 %v1361, 1.0
        %v1366 = vadd.f32 %v1363, 1.0
        %v1367 = vrcp.pop %v1364
        %v1368 = vmul.f32 1.0, %v1367
        %v1369 = vrcp.pop %v1365
        %v1370 = vmul.f32 1.0, %v1369
        %v1371 = vrcp.pop %v1366
        %v1372 = vmul.f32 1.0, %v1371
        %v1373 = vtanh.pop %v1354
        %v1374 = vmul.f32 %v1181, %v1370
        %v1375 = vmul.f32 %v1368, %v1373
        %v1376 = vadd.f32 %v1374, %v1375
        %v1377 = vtanh.pop %v1376
        %v1378 = vmul.f32 %v1372, %v1377
        %s1379 = scalar_lea.vmem %s335, 12 [#allocation4]
        %v1380 = vld [vmem:[%s1379] sm:$0xf]
        %v1381 = vpack.c.bf16 %v1378, %v1378
        %1382 = vmatprep.subr.bf16.mxu0 %v552
        %1383 = vmatpush1.bf16.msra.mxu0 %v551
        %1384 = vmatprep.subr.bf16.mxu0 %v556
        %1385 = vmatpush1.bf16.msra.mxu0 %v555
        %1386 = vmatprep.subr.bf16.mxu0 %v560
        %1387 = vmatpush1.bf16.msra.mxu0 %v559
        %1388 = vmatprep.subr.bf16.mxu0 %v564
        %1389 = vmatpush1.bf16.msra.mxu0 %v563
        %1390 = vmatprep.subr.bf16.mxu0 %v568
        %1391 = vmatpush1.bf16.msra.mxu0 %v567
        %1392 = vmatprep.subr.bf16.mxu0 %v572
        %1393 = vmatpush1.bf16.msra.mxu0 %v571
        %1394 = vmatprep.subr.bf16.mxu0 %v576
        %1395 = vmatpush1.bf16.msra.mxu0 %v575
        %1396 = vmatprep.subr.bf16.mxu0 %v580
        %1397 = vmatpush1.bf16.msra.mxu0 %v579
        %1398 = vmatprep.subr.bf16.mxu0 0
        %1399 = vmatpush1.bf16.msra.mxu0 0
        %1400 = vmatprep.subr.bf16.mxu0 0
        %1401 = vmatpush1.bf16.msra.mxu0 0
        %1402 = vmatprep.subr.bf16.mxu0 0
        %1403 = vmatpush1.bf16.msra.mxu0 0
        %1404 = vmatprep.subr.bf16.mxu0 0
        %1405 = vmatpush1.bf16.msra.mxu0 0
        %1406 = vmatprep.subr.bf16.mxu0 0
        %1407 = vmatpush1.bf16.msra.mxu0 0
        %1408 = vmatprep.subr.bf16.mxu0 0
        %1409 = vmatpush1.bf16.msra.mxu0 0
        %1410 = vmatprep.subr.bf16.mxu0 0
        %1411 = vmatpush1.bf16.msra.mxu0 0
        %1412 = vmatprep.subr.bf16.mxu0 0
        %1413 = vmatpush1.bf16.msra.mxu0 0
        %1414 = vmatprep.mubr.bf16.mxu0 0
        %1415 = vmatmul.mubr.bf16.gmra.mrb[0].mxu0 %v1381
        %v1416 = vpop.f32.mrb[0].mxu0
        %v1417 = vadd.f32 0.0, %v1416
        %v1418 = vpop.f32.mrb[0].mxu0
        %v1419 = vadd.f32 0.0, %v1418
        %v1420 = vpop.f32.mrb[0].mxu0
        %v1421 = vpop.f32.mrb[0].mxu0
        %1422 = vdwg.mxu0
        %1423 = vmatprep.subr.bf16.mxu0 %v554
        %1424 = vmatpush1.bf16.msra.mxu0 %v553
        %1425 = vmatprep.subr.bf16.mxu0 %v558
        %1426 = vmatpush1.bf16.msra.mxu0 %v557
        %1427 = vmatprep.subr.bf16.mxu0 %v562
        %1428 = vmatpush1.bf16.msra.mxu0 %v561
        %1429 = vmatprep.subr.bf16.mxu0 %v566
        %1430 = vmatpush1.bf16.msra.mxu0 %v565
        %1431 = vmatprep.subr.bf16.mxu0 %v570
        %1432 = vmatpush1.bf16.msra.mxu0 %v569
        %1433 = vmatprep.subr.bf16.mxu0 %v574
        %1434 = vmatpush1.bf16.msra.mxu0 %v573
        %1435 = vmatprep.subr.bf16.mxu0 %v578
        %1436 = vmatpush1.bf16.msra.mxu0 %v577
        %1437 = vmatprep.subr.bf16.mxu0 %v582
        %1438 = vmatpush1.bf16.msra.mxu0 %v581
        %1439 = vmatprep.subr.bf16.mxu0 0
        %1440 = vmatpush1.bf16.msra.mxu0 0
        %1441 = vmatprep.subr.bf16.mxu0 0
        %1442 = vmatpush1.bf16.msra.mxu0 0
        %1443 = vmatprep.subr.bf16.mxu0 0
        %1444 = vmatpush1.bf16.msra.mxu0 0
        %1445 = vmatprep.subr.bf16.mxu0 0
        %1446 = vmatpush1.bf16.msra.mxu0 0
        %1447 = vmatprep.subr.bf16.mxu0 0
        %1448 = vmatpush1.bf16.msra.mxu0 0
        %1449 = vmatprep.subr.bf16.mxu0 0
        %1450 = vmatpush1.bf16.msra.mxu0 0
        %1451 = vmatprep.subr.bf16.mxu0 0
        %1452 = vmatpush1.bf16.msra.mxu0 0
        %1453 = vmatprep.subr.bf16.mxu0 0
        %1454 = vmatpush1.bf16.msra.mxu0 0
        %1455 = vmatprep.mubr.bf16.mxu0 0
        %1456 = vmatmul.mubr.bf16.gmra.mrb[0].mxu0 %v1381
        %v1457 = vpop.f32.mrb[0].mxu0
        %v1458 = vadd.f32 0.0, %v1457
        %v1459 = vpop.f32.mrb[0].mxu0
        %v1460 = vadd.f32 0.0, %v1459
        %v1461 = vpop.f32.mrb[0].mxu0
        %v1462 = vpop.f32.mrb[0].mxu0
        %1463 = vdwg.mxu0
        %1464 = vmatprep.subr.bf16.mxu0 %v794
        %1465 = vmatpush1.bf16.msra.mxu0 %v793
        %1466 = vmatprep.subr.bf16.mxu0 %v798
        %1467 = vmatpush1.bf16.msra.mxu0 %v797
        %1468 = vmatprep.subr.bf16.mxu0 %v802
        %1469 = vmatpush1.bf16.msra.mxu0 %v801
        %1470 = vmatprep.subr.bf16.mxu0 %v806
        %1471 = vmatpush1.bf16.msra.mxu0 %v805
        %1472 = vmatprep.subr.bf16.mxu0 %v810
        %1473 = vmatpush1.bf16.msra.mxu0 %v809
        %1474 = vmatprep.subr.bf16.mxu0 %v814
        %1475 = vmatpush1.bf16.msra.mxu0 %v813
        %1476 = vmatprep.subr.bf16.mxu0 %v818
        %1477 = vmatpush1.bf16.msra.mxu0 %v817
        %1478 = vmatprep.subr.bf16.mxu0 %v822
        %1479 = vmatpush1.bf16.msra.mxu0 %v821
        %1480 = vmatprep.subr.bf16.mxu0 0
        %1481 = vmatpush1.bf16.msra.mxu0 0
        %1482 = vmatprep.subr.bf16.mxu0 0
        %1483 = vmatpush1.bf16.msra.mxu0 0
        %1484 = vmatprep.subr.bf16.mxu0 0
        %1485 = vmatpush1.bf16.msra.mxu0 0
        %1486 = vmatprep.subr.bf16.mxu0 0
        %1487 = vmatpush1.bf16.msra.mxu0 0
        %1488 = vmatprep.subr.bf16.mxu0 0
        %1489 = vmatpush1.bf16.msra.mxu0 0
        %1490 = vmatprep.subr.bf16.mxu0 0
        %1491 = vmatpush1.bf16.msra.mxu0 0
        %1492 = vmatprep.subr.bf16.mxu0 0
        %1493 = vmatpush1.bf16.msra.mxu0 0
        %1494 = vmatprep.subr.bf16.mxu0 0
        %1495 = vmatpush1.bf16.msra.mxu0 0
        %1496 = vmatprep.mubr.bf16.mxu0 0
        %1497 = vmatmul.mubr.bf16.gmra.mrb[0].mxu0 %v1380
        %v1498 = vpop.f32.mrb[0].mxu0
        %v1499 = vadd.f32 %v1417, %v1498
        %v1500 = vpop.f32.mrb[0].mxu0
        %v1501 = vadd.f32 %v1419, %v1500
        %v1502 = vpop.f32.mrb[0].mxu0
        %v1503 = vpop.f32.mrb[0].mxu0
        %1504 = vdwg.mxu0
        %1505 = vmatprep.subr.bf16.mxu0 %v796
        %1506 = vmatpush1.bf16.msra.mxu0 %v795
        %1507 = vmatprep.subr.bf16.mxu0 %v800
        %1508 = vmatpush1.bf16.msra.mxu0 %v799
        %1509 = vmatprep.subr.bf16.mxu0 %v804
        %1510 = vmatpush1.bf16.msra.mxu0 %v803
        %1511 = vmatprep.subr.bf16.mxu0 %v808
        %1512 = vmatpush1.bf16.msra.mxu0 %v807
        %1513 = vmatprep.subr.bf16.mxu0 %v812
        %1514 = vmatpush1.bf16.msra.mxu0 %v811
        %1515 = vmatprep.subr.bf16.mxu0 %v816
        %1516 = vmatpush1.bf16.msra.mxu0 %v815
        %1517 = vmatprep.subr.bf16.mxu0 %v820
        %1518 = vmatpush1.bf16.msra.mxu0 %v819
        %1519 = vmatprep.subr.bf16.mxu0 %v824
        %1520 = vmatpush1.bf16.msra.mxu0 %v823
        %1521 = vmatprep.subr.bf16.mxu0 0
        %1522 = vmatpush1.bf16.msra.mxu0 0
        %1523 = vmatprep.subr.bf16.mxu0 0
        %1524 = vmatpush1.bf16.msra.mxu0 0
        %1525 = vmatprep.subr.bf16.mxu0 0
        %1526 = vmatpush1.bf16.msra.mxu0 0
        %1527 = vmatprep.subr.bf16.mxu0 0
        %1528 = vmatpush1.bf16.msra.mxu0 0
        %1529 = vmatprep.subr.bf16.mxu0 0
        %1530 = vmatpush1.bf16.msra.mxu0 0
        %1531 = vmatprep.subr.bf16.mxu0 0
        %1532 = vmatpush1.bf16.msra.mxu0 0
        %1533 = vmatprep.subr.bf16.mxu0 0
        %1534 = vmatpush1.bf16.msra.mxu0 0
        %1535 = vmatprep.subr.bf16.mxu0 0
        %1536 = vmatpush1.bf16.msra.mxu0 0
        %1537 = vmatprep.mubr.bf16.mxu0 0
        %1538 = vmatmul.mubr.bf16.gmra.mrb[0].mxu0 %v1380
        %v1539 = vpop.f32.mrb[0].mxu0
        %v1540 = vadd.f32 %v1458, %v1539
        %v1541 = vpop.f32.mrb[0].mxu0
        %v1542 = vadd.f32 %v1460, %v1541
        %v1543 = vpop.f32.mrb[0].mxu0
        %v1544 = vpop.f32.mrb[0].mxu0
        %1545 = vdwg.mxu0
        %v1546 = vadd.f32 %v1499, %v944
        %v1547 = vadd.f32 %v1501, %v948
        %v1548 = vadd.f32 %v1540, %v952
        %v1549 = vadd.f32 %v1542, %v956
        %v1550 = vxor.u32 %v1546, 2147483648
        %v1551 = vxor.u32 %v1547, 2147483648
        %v1552 = vxor.u32 %v1548, 2147483648
        %v1553 = vmul.f32 %v1550, 1.442695
        %v1554 = vpow.pop %v1553
        %v1555 = vmul.f32 %v1551, 1.442695
        %v1556 = vpow.pop %v1555
        %v1557 = vmul.f32 %v1552, 1.442695
        %v1558 = vpow.pop %v1557
        %v1559 = vadd.f32 %v1554, 1.0
        %v1560 = vadd.f32 %v1556, 1.0
        %v1561 = vadd.f32 %v1558, 1.0
        %v1562 = vrcp.pop %v1559
        %v1563 = vmul.f32 1.0, %v1562
        %v1564 = vrcp.pop %v1560
        %v1565 = vmul.f32 1.0, %v1564
        %v1566 = vrcp.pop %v1561
        %v1567 = vmul.f32 1.0, %v1566
        %v1568 = vtanh.pop %v1549
        %v1569 = vmul.f32 %v1376, %v1565
        %v1570 = vmul.f32 %v1563, %v1568
        %v1571 = vadd.f32 %v1569, %v1570
        %v1572 = vtanh.pop %v1571
        %v1573 = vmul.f32 %v1567, %v1572
        %1574 = vst [vmem:[#allocation2] sm:$0xff] %v1573
        %1575 = vst [vmem:[#allocation3] sm:$0xff] %v1571
        %p1576 = scmp.eq.s32.totalorder %s31, 1
        // Predicated region
        $region69: #{tpu_custom_call.1} parent=43 // pred_check
          %p1577 = pneg %p1576
        $region70: #{tpu_custom_call.1} parent=43 // pred_check_branch
          %1579 = sbr.rel (%p1577) target = $region72
        $region71: #{tpu_custom_call.1} parent=43 // pred_region
          %1580 = vst [vmem:[#allocation13] sm:$0xff] %v1573
          %1581 = vst [vmem:[#allocation14] sm:$0xff] %v1571
        $region72: #{tpu_custom_call.1} parent=43 // pred_fallthru
          _
        // Predicated region
        $region73: #{tpu_custom_call.1} parent=43 // pred_check
          %p1582 = pneg %p199
        $region74: #{tpu_custom_call.1} parent=43 // pred_check_branch
          %1584 = sbr.rel (%p1582) target = $region76
        $region75: #{tpu_custom_call.1} parent=43 // pred_region
          %s1586 = ssub.s32 128, 128
          %1587 = vsyncadd [#allocation6], %s1586
          %s1588 = smul.addr %s30, 128
          %s1589 = scalar_lea.hbm %s6, %s1588
          %s1591 = sshll.u32 [#allocation13], 4
          %s1592 = int_to_ptr.vmem [resolvable:$true] %s1591
          %1594 = dma.vmem_to_hbm [thread:$0]  %s1592, 128, %s1589, [#allocation6]
        $region76: #{tpu_custom_call.1} parent=43 // pred_fallthru
          _
        // Predicated region
        $region77: #{tpu_custom_call.1} parent=43 // pred_check
          %p1595 = pneg %p225
        $region78: #{tpu_custom_call.1} parent=43 // pred_check_branch
          %1597 = sbr.rel (%p1595) target = $region80
        $region79: #{tpu_custom_call.1} parent=43 // pred_region
          %s1599 = ssub.s32 128, 128
          %1600 = vsyncadd [#allocation15], %s1599
          %s1601 = smul.addr %s30, 128
          %s1602 = scalar_lea.hbm %s7, %s1601
          %s1604 = sshll.u32 [#allocation14], 4
          %s1605 = int_to_ptr.vmem [resolvable:$true] %s1604
          %1607 = dma.vmem_to_hbm [thread:$0]  %s1605, 128, %s1602, [#allocation15]
        $region80: #{tpu_custom_call.1} parent=43 // pred_fallthru
          _
        // Predicated region
        $region81: #{tpu_custom_call.1} parent=43 // pred_check
          %p1608 = pneg %p199
        $region82: #{tpu_custom_call.1} parent=43 // pred_check_branch
          %1610 = sbr.rel (%p1608) target = $region84
        $region83: #{tpu_custom_call.1} parent=43 // pred_region
          %1611 = dma.done [#allocation6], 128
        $region84: #{tpu_custom_call.1} parent=43 // pred_fallthru
          _
        // Predicated region
        $region85: #{tpu_custom_call.1} parent=43 // pred_check
          %p1612 = pneg %p225
        $region86: #{tpu_custom_call.1} parent=43 // pred_check_branch
          %1614 = sbr.rel (%p1612) target = $region88
        $region87: #{tpu_custom_call.1} parent=43 // pred_region
          %1615 = dma.done [#allocation15], 128
        $region88: #{tpu_custom_call.1} parent=43 // pred_fallthru
          _
      $region44: #{tpu_custom_call.1} parent=5 // pred_fallthru
        _
      %p1616 = scmp.le.s32.totalorder 2, %s21
      // Predicated region
      $region89: #{tpu_custom_call.1} parent=5 // pred_check
        %p1617 = pneg %p1616
      $region90: #{tpu_custom_call.1} parent=5 // pred_check_branch
        %1619 = sbr.rel (%p1617) target = $region92
      $region91: #{tpu_custom_call.1} parent=5 // pred_region
        %s1620 = ssub.s32 %s21, 2
      $region92: #{tpu_custom_call.1} parent=5 // pred_fallthru
        _
    $region6: #{tpu_custom_call.1} parent=1 // loop_footer
      %s25 = sadd.s32 1, %s21
    $region7: #{tpu_custom_call.1} parent=1 // loop_footer_branch
      %20 = sbr.rel target = $region3
    $region8: #{tpu_custom_call.1} parent=1 // loop_exit
      _
    %1621 = vsyncpa [#allocation5], 1
    %s1622 = scalar_lea.sflag [#allocation5], 1
    %1623 = vsyncpa %s1622, 1
    %1624 = vsyncpa [#allocation8], 1
    %1625 = vsyncpa [#allocation11], 1
    %1626 = vsyncpa [#allocation6], 1
    %s1627 = scalar_lea.sflag [#allocation6], 1
    %1628 = vsyncpa %s1627, 1
    %1629 = vsyncpa [#allocation15], 1

</llo_original>
